<compile_context>
chip_gen: v7x
topology: tpu7x:2x2x1
jax: 0.10.0
libtpu: 0.0.40
codegen_flags: <defaults>
</compile_context>

<pallas_src>
import functools

import jax
import jax.numpy as jnp
from jax.experimental import pallas as pl
from jax.experimental.pallas import tpu as pltpu


def _encoder_block_kernel(
    x_ref,        # (R, E)    R = batch_tile * n_agents rows of the flattened batch
    wq_ref,       # (E, E)    q projection weight^T
    wk_ref,       # (E, E)
    wv_ref,       # (E, E)
    bq_ref,       # (1, E)
    bk_ref,       # (1, E)
    bv_ref,       # (1, E)
    wo_ref,       # (E, E)    out_proj.weight^T
    bo_ref,       # (1, E)
    g1_ref,       # (R, E)    norm1.weight tiled over the batch tile
    beta1_ref,    # (R, E)
    w1_ref,       # (E, 4E)   ffn linear1 weight^T
    b1_ref,       # (1, 4E)
    w2_ref,       # (4E, E)   ffn linear2 weight^T
    b2_ref,       # (1, E)
    g2_ref,       # (R, E)
    beta2_ref,    # (R, E)
    out_ref,      # (R, E)
    ctx_ref,      # (R, E) f32 VMEM scratch: assembled attention context
    *,
    n_heads: int,
    n_agents: int,
    batch_tile: int,
):
    x = x_ref[...]                         # (R, E) f32
    _, E = x.shape
    A = n_agents
    H = n_heads
    Dh = E // H
    scale = 1.0 / float(Dh) ** 0.5
    eps = 1e-5
    inv_n = 1.0 / float(A * E)

    # ---- Q/K/V projections: three full-slab MXU matmuls ----------------------
    q = jnp.dot(x, wq_ref[...], preferred_element_type=jnp.float32) + bq_ref[...]
    k = jnp.dot(x, wk_ref[...], preferred_element_type=jnp.float32) + bk_ref[...]
    v = jnp.dot(x, wv_ref[...], preferred_element_type=jnp.float32) + bv_ref[...]

    # ---- per-(batch element, head) scores + softmax (tiny (A, A) blocks) -----
    # Contexts are written into a VMEM scratch slab so the output projection
    # below is a single (R, E) @ (E, E) matmul instead of H tiny padded ones.
    for bb in range(batch_tile):
        r0 = bb * A
        for h in range(H):
            c0 = h * Dh
            qh = q[r0:r0 + A, c0:c0 + Dh]          # (A, Dh)
            kh = k[r0:r0 + A, c0:c0 + Dh]
            vh = v[r0:r0 + A, c0:c0 + Dh]
            s = jax.lax.dot_general(               # q @ k^T without explicit .T
                qh, kh, (((1,), (1,)), ((), ())),
                preferred_element_type=jnp.float32) * scale
            s = s - jnp.max(s, axis=-1, keepdims=True)
            p = jnp.exp(s)
            p = p * pl.reciprocal(jnp.sum(p, axis=-1, keepdims=True), approx=False)
            ctx_ref[r0:r0 + A, c0:c0 + Dh] = jnp.dot(
                p, vh, preferred_element_type=jnp.float32)

    # ---- single output projection over the whole slab ------------------------
    attended = jnp.dot(ctx_ref[...], wo_ref[...],
                       preferred_element_type=jnp.float32) + bo_ref[...]

    x1 = x + attended

    # ---- joint LayerNorm over (A, E) per batch element, fused one-pass stats -
    def joint_layernorm(z, gamma, beta):
        pieces = []
        for bb in range(batch_tile):
            zb = z[bb * A:(bb + 1) * A, :]
            s1 = jnp.sum(zb, keepdims=True)                    # (1, 1)
            s2 = jnp.sum(zb * zb, keepdims=True)               # (1, 1)
            mu = s1 * inv_n
            var = s2 * inv_n - mu * mu
            pieces.append((zb - mu) * jax.lax.rsqrt(var + eps))
        zn = pieces[0] if batch_tile == 1 else jnp.concatenate(pieces, axis=0)
        return zn * gamma + beta

    n1 = joint_layernorm(x1, g1_ref[...], beta1_ref[...])

    # ---- feedforward: Linear -> ReLU -> Linear -> ReLU (full-slab matmuls) ---
    hdn = jnp.dot(n1, w1_ref[...], preferred_element_type=jnp.float32) + b1_ref[...]
    hdn = jnp.maximum(hdn, 0.0)
    ff = jnp.dot(hdn, w2_ref[...], preferred_element_type=jnp.float32) + b2_ref[...]
    ff = jnp.maximum(ff, 0.0)

    # ---- residual 2 + joint LayerNorm -----------------------------------------
    x2 = ff + x1
    out_ref[...] = joint_layernorm(x2, g2_ref[...], beta2_ref[...])


_BCAST2D = lambda i: (0, 0)   # shared index map for untiled 2-D operands


@functools.partial(jax.jit, static_argnames=("n_heads", "batch_tile"))
def transformer_encoder_block(x, params, *, n_heads, batch_tile=None):
    """x: (B, A, E) float32.  params: see init_params (pre-transposed/split)."""
    B, A, E = x.shape
    if batch_tile is None:
        # Target >= 128 rows per grid step (MXU-shaped) while dividing B evenly;
        # for small B this collapses the whole batch into a single invocation.
        target = max(1, -(-128 // A))          # ceil(128 / A)
        batch_tile = min(B, target)
        while B % batch_tile:
            batch_tile -= 1
    R = batch_tile * A
    n_tiles = B // batch_tile

    (wq, wk, wv, bq, bk, bv, wo, bo,
     g1, beta1, w1, b1, w2, b2, g2, beta2) = params

    x_flat = x.reshape(B * A, E)
    # LayerNorm affine params are per-(A, E); tile them to one row slab so the
    # kernel applies them with a plain elementwise multiply/add.
    g1_t = jnp.tile(g1, (batch_tile, 1))
    beta1_t = jnp.tile(beta1, (batch_tile, 1))
    g2_t = jnp.tile(g2, (batch_tile, 1))
    beta2_t = jnp.tile(beta2, (batch_tile, 1))

    operands = (x_flat, wq, wk, wv, bq, bk, bv, wo, bo,
                g1_t, beta1_t, w1, b1, w2, b2, g2_t, beta2_t)

    in_specs = [pl.BlockSpec((R, E), lambda i: (i, 0))]
    in_specs += [pl.BlockSpec(a.shape, _BCAST2D) for a in operands[1:]]

    out_flat = pl.pallas_call(
        functools.partial(_encoder_block_kernel, n_heads=n_heads,
                          n_agents=A, batch_tile=batch_tile),
        out_shape=jax.ShapeDtypeStruct((B * A, E), jnp.float32),
        grid=(n_tiles,),
        in_specs=in_specs,
        out_specs=pl.BlockSpec((R, E), lambda i: (i, 0)),
        scratch_shapes=[pltpu.VMEM((R, E), jnp.float32)],
        compiler_params=pltpu.CompilerParams(
            dimension_semantics=("parallel",)),
    )(*operands)
    return out_flat.reshape(B, A, E)


def init_params(key, n_agents, embed_dim):
    """Deterministic synthetic parameters matching the PyTorch module shapes,
    pre-transposed (x @ W layout) and with in_proj pre-split into q/k/v."""
    E, A = embed_dim, n_agents
    ks = jax.random.split(key, 8)
    s = 0.1
    in_proj_w = s * jax.random.normal(ks[0], (3 * E, E), jnp.float32)   # torch (3E, E)
    in_proj_b = s * jax.random.normal(ks[1], (3 * E,), jnp.float32)
    out_proj_w = s * jax.random.normal(ks[2], (E, E), jnp.float32)      # torch (E, E)
    out_proj_b = s * jax.random.normal(ks[3], (E,), jnp.float32)
    lin1_w = s * jax.random.normal(ks[4], (4 * E, E), jnp.float32)      # torch (4E, E)
    lin1_b = s * jax.random.normal(ks[5], (4 * E,), jnp.float32)
    lin2_w = s * jax.random.normal(ks[6], (E, 4 * E), jnp.float32)      # torch (E, 4E)
    lin2_b = s * jax.random.normal(ks[7], (E,), jnp.float32)
    # LayerNorm affine params over normalized_shape = (n_agents, embed_dim)
    g1 = jnp.ones((A, E), jnp.float32)
    beta1 = jnp.zeros((A, E), jnp.float32)
    g2 = jnp.ones((A, E), jnp.float32)
    beta2 = jnp.zeros((A, E), jnp.float32)

    wq = in_proj_w[:E, :].T                     # (E, E)
    wk = in_proj_w[E:2 * E, :].T
    wv = in_proj_w[2 * E:, :].T
    bq = in_proj_b[:E].reshape(1, E)
    bk = in_proj_b[E:2 * E].reshape(1, E)
    bv = in_proj_b[2 * E:].reshape(1, E)

    return (
        wq, wk, wv, bq, bk, bv,
        out_proj_w.T,                           # (E, E)
        out_proj_b.reshape(1, E),
        g1, beta1,
        lin1_w.T,                               # (E, 4E)
        lin1_b.reshape(1, 4 * E),
        lin2_w.T,                               # (4E, E)
        lin2_b.reshape(1, E),
        g2, beta2,
    )


def reference(x, params, *, n_heads):
    """Pure-JAX reference reproducing the PyTorch forward semantics."""
    (wq, wk, wv, bq, bk, bv, wo_t, bo,
     g1, beta1, w1_t, b1, w2_t, b2, g2, beta2) = params
    B, A, E = x.shape
    Dh = E // n_heads
    eps = 1e-5

    q = x @ wq + bq
    k = x @ wk + bk
    v = x @ wv + bv
    qh = q.reshape(B, A, n_heads, Dh).transpose(0, 2, 1, 3)
    kh = k.reshape(B, A, n_heads, Dh).transpose(0, 2, 1, 3)
    vh = v.reshape(B, A, n_heads, Dh).transpose(0, 2, 1, 3)
    s = jnp.einsum("bhad,bhcd->bhac", qh, kh) / jnp.sqrt(jnp.float32(Dh))
    p = jax.nn.softmax(s, axis=-1)
    ctx = jnp.einsum("bhac,bhcd->bhad", p, vh).transpose(0, 2, 1, 3).reshape(B, A, E)
    attended = ctx @ wo_t + bo

    x1 = x + attended
    mu1 = jnp.mean(x1, axis=(1, 2), keepdims=True)
    var1 = jnp.mean((x1 - mu1) ** 2, axis=(1, 2), keepdims=True)
    n1 = (x1 - mu1) / jnp.sqrt(var1 + eps) * g1 + beta1

    h = jnp.maximum(n1 @ w1_t + b1, 0.0)
    f = jnp.maximum(h @ w2_t + b2, 0.0)

    x2 = f + x1
    mu2 = jnp.mean(x2, axis=(1, 2), keepdims=True)
    var2 = jnp.mean((x2 - mu2) ** 2, axis=(1, 2), keepdims=True)
    return (x2 - mu2) / jnp.sqrt(var2 + eps) * g2 + beta2


if __name__ == "__main__":
    B, A, E, H = 2, 8, 32, 4  # batch, n_agents, embed_dim, n_heads

    key = jax.random.PRNGKey(0)
    kx, kp = jax.random.split(key)
    x = jax.random.normal(kx, (B, A, E), jnp.float32)
    params = init_params(kp, A, E)

    out = transformer_encoder_block(x, params, n_heads=H)
    out = jax.block_until_ready(out)

    ref = reference(x, params, n_heads=H)
    assert out.shape == (B, A, E)
    err = float(jnp.max(jnp.abs(out - ref)))
    assert jnp.allclose(out, ref, rtol=1e-4, atol=1e-4), err

    print("KERNEL_OK")
</pallas_src>

<mosaic_0001>
module attributes {stable_mosaic.version = 11 : i64} {
  func.func @_encoder_block_kernel(%arg0: i32, %arg1: memref<16x32xf32, #tpu.memory_space<vmem>>, %arg2: memref<32x32xf32, #tpu.memory_space<vmem>>, %arg3: memref<32x32xf32, #tpu.memory_space<vmem>>, %arg4: memref<32x32xf32, #tpu.memory_space<vmem>>, %arg5: memref<1x32xf32, #tpu.memory_space<vmem>>, %arg6: memref<1x32xf32, #tpu.memory_space<vmem>>, %arg7: memref<1x32xf32, #tpu.memory_space<vmem>>, %arg8: memref<32x32xf32, #tpu.memory_space<vmem>>, %arg9: memref<1x32xf32, #tpu.memory_space<vmem>>, %arg10: memref<16x32xf32, #tpu.memory_space<vmem>>, %arg11: memref<16x32xf32, #tpu.memory_space<vmem>>, %arg12: memref<32x128xf32, #tpu.memory_space<vmem>>, %arg13: memref<1x128xf32, #tpu.memory_space<vmem>>, %arg14: memref<128x32xf32, #tpu.memory_space<vmem>>, %arg15: memref<1x32xf32, #tpu.memory_space<vmem>>, %arg16: memref<16x32xf32, #tpu.memory_space<vmem>>, %arg17: memref<16x32xf32, #tpu.memory_space<vmem>>, %arg18: memref<16x32xf32, #tpu.memory_space<vmem>>, %arg19: memref<16x32xf32, #tpu.memory_space<vmem>>) attributes {dimension_semantics = [#tpu.dimension_semantics<parallel>], iteration_bounds = array<i64: 1>, scalar_prefetch = 0 : i64, scratch_operands = 1 : i64, tpu.core_type = #tpu.core_type<tc>, window_params = [{transform_indices = @transform_0, window_bounds = array<i64: 16, 32>}, {pipeline_mode = #tpu.pipeline_mode<synchronous>, transform_indices = @transform_1, window_bounds = array<i64: 32, 32>}, {pipeline_mode = #tpu.pipeline_mode<synchronous>, transform_indices = @transform_2, window_bounds = array<i64: 32, 32>}, {pipeline_mode = #tpu.pipeline_mode<synchronous>, transform_indices = @transform_3, window_bounds = array<i64: 32, 32>}, {pipeline_mode = #tpu.pipeline_mode<synchronous>, transform_indices = @transform_4, window_bounds = array<i64: 1, 32>}, {pipeline_mode = #tpu.pipeline_mode<synchronous>, transform_indices = @transform_5, window_bounds = array<i64: 1, 32>}, {pipeline_mode = #tpu.pipeline_mode<synchronous>, transform_indices = @transform_6, window_bounds = array<i64: 1, 32>}, {pipeline_mode = #tpu.pipeline_mode<synchronous>, transform_indices = @transform_7, window_bounds = array<i64: 32, 32>}, {pipeline_mode = #tpu.pipeline_mode<synchronous>, transform_indices = @transform_8, window_bounds = array<i64: 1, 32>}, {pipeline_mode = #tpu.pipeline_mode<synchronous>, transform_indices = @transform_9, window_bounds = array<i64: 16, 32>}, {pipeline_mode = #tpu.pipeline_mode<synchronous>, transform_indices = @transform_10, window_bounds = array<i64: 16, 32>}, {pipeline_mode = #tpu.pipeline_mode<synchronous>, transform_indices = @transform_11, window_bounds = array<i64: 32, 128>}, {pipeline_mode = #tpu.pipeline_mode<synchronous>, transform_indices = @transform_12, window_bounds = array<i64: 1, 128>}, {pipeline_mode = #tpu.pipeline_mode<synchronous>, transform_indices = @transform_13, window_bounds = array<i64: 128, 32>}, {pipeline_mode = #tpu.pipeline_mode<synchronous>, transform_indices = @transform_14, window_bounds = array<i64: 1, 32>}, {pipeline_mode = #tpu.pipeline_mode<synchronous>, transform_indices = @transform_15, window_bounds = array<i64: 16, 32>}, {pipeline_mode = #tpu.pipeline_mode<synchronous>, transform_indices = @transform_16, window_bounds = array<i64: 16, 32>}, {transform_indices = @transform_17, window_bounds = array<i64: 16, 32>}]} {
    %c0 = arith.constant 0 : index
    %c0_0 = arith.constant 0 : index
    %0 = vector.load %arg1[%c0, %c0_0] : memref<16x32xf32, #tpu.memory_space<vmem>>, vector<16x32xf32>
    %c0_1 = arith.constant 0 : index
    %c0_2 = arith.constant 0 : index
    %1 = vector.load %arg2[%c0_1, %c0_2] : memref<32x32xf32, #tpu.memory_space<vmem>>, vector<32x32xf32>
    %cst = arith.constant dense<0.000000e+00> : vector<16x32xf32>
    %2 = tpu.matmul %0, %1, %cst {dimension_numbers = #tpu.dot_dimension_numbers<[1], [0], [0], [1], [0, 0, 1, 1], [], []>} : vector<16x32xf32>, vector<32x32xf32>, vector<16x32xf32> -> vector<16x32xf32>
    %c0_3 = arith.constant 0 : index
    %c0_4 = arith.constant 0 : index
    %3 = vector.load %arg5[%c0_3, %c0_4] : memref<1x32xf32, #tpu.memory_space<vmem>>, vector<1x32xf32>
    %4 = vector.broadcast %3 : vector<1x32xf32> to vector<16x32xf32>
    %5 = arith.addf %2, %4 : vector<16x32xf32>
    %c0_5 = arith.constant 0 : index
    %c0_6 = arith.constant 0 : index
    %6 = vector.load %arg3[%c0_5, %c0_6] : memref<32x32xf32, #tpu.memory_space<vmem>>, vector<32x32xf32>
    %cst_7 = arith.constant dense<0.000000e+00> : vector<16x32xf32>
    %7 = tpu.matmul %0, %6, %cst_7 {dimension_numbers = #tpu.dot_dimension_numbers<[1], [0], [0], [1], [0, 0, 1, 1], [], []>} : vector<16x32xf32>, vector<32x32xf32>, vector<16x32xf32> -> vector<16x32xf32>
    %c0_8 = arith.constant 0 : index
    %c0_9 = arith.constant 0 : index
    %8 = vector.load %arg6[%c0_8, %c0_9] : memref<1x32xf32, #tpu.memory_space<vmem>>, vector<1x32xf32>
    %9 = vector.broadcast %8 : vector<1x32xf32> to vector<16x32xf32>
    %10 = arith.addf %7, %9 : vector<16x32xf32>
    %c0_10 = arith.constant 0 : index
    %c0_11 = arith.constant 0 : index
    %11 = vector.load %arg4[%c0_10, %c0_11] : memref<32x32xf32, #tpu.memory_space<vmem>>, vector<32x32xf32>
    %cst_12 = arith.constant dense<0.000000e+00> : vector<16x32xf32>
    %12 = tpu.matmul %0, %11, %cst_12 {dimension_numbers = #tpu.dot_dimension_numbers<[1], [0], [0], [1], [0, 0, 1, 1], [], []>} : vector<16x32xf32>, vector<32x32xf32>, vector<16x32xf32> -> vector<16x32xf32>
    %c0_13 = arith.constant 0 : index
    %c0_14 = arith.constant 0 : index
    %13 = vector.load %arg7[%c0_13, %c0_14] : memref<1x32xf32, #tpu.memory_space<vmem>>, vector<1x32xf32>
    %14 = vector.broadcast %13 : vector<1x32xf32> to vector<16x32xf32>
    %15 = arith.addf %12, %14 : vector<16x32xf32>
    %16 = vector.extract_strided_slice %5 {offsets = [0, 0], sizes = [8, 8], strides = [1, 1]} : vector<16x32xf32> to vector<8x8xf32>
    %17 = vector.extract_strided_slice %10 {offsets = [0, 0], sizes = [8, 8], strides = [1, 1]} : vector<16x32xf32> to vector<8x8xf32>
    %18 = vector.extract_strided_slice %15 {offsets = [0, 0], sizes = [8, 8], strides = [1, 1]} : vector<16x32xf32> to vector<8x8xf32>
    %cst_15 = arith.constant dense<0.000000e+00> : vector<8x8xf32>
    %19 = tpu.matmul %16, %17, %cst_15 {dimension_numbers = #tpu.dot_dimension_numbers<[1], [1], [0], [0], [0, 0, 1, 0], [], []>} : vector<8x8xf32>, vector<8x8xf32>, vector<8x8xf32> -> vector<8x8xf32>
    %cst_16 = arith.constant 0.353553385 : f32
    %20 = vector.broadcast %cst_16 : f32 to vector<8x8xf32>
    %21 = arith.mulf %19, %20 : vector<8x8xf32>
    %cst_17 = arith.constant dense<0xFF800000> : vector<8xf32>
    %22 = vector.multi_reduction <maximumf>, %21, %cst_17 [1] : vector<8x8xf32> to vector<8xf32>
    %23 = vector.shape_cast %22 : vector<8xf32> to vector<8x1xf32>
    %24 = vector.broadcast %23 : vector<8x1xf32> to vector<8x8xf32>
    %25 = arith.subf %21, %24 : vector<8x8xf32>
    %26 = math.exp %25 : vector<8x8xf32>
    %cst_18 = arith.constant dense<0.000000e+00> : vector<8xf32>
    %27 = vector.multi_reduction <add>, %26, %cst_18 [1] : vector<8x8xf32> to vector<8xf32>
    %28 = vector.shape_cast %27 : vector<8xf32> to vector<8x1xf32>
    %29 = tpu.reciprocal %28 : vector<8x1xf32> -> vector<8x1xf32>
    %30 = vector.broadcast %29 : vector<8x1xf32> to vector<8x8xf32>
    %31 = arith.mulf %26, %30 : vector<8x8xf32>
    %cst_19 = arith.constant dense<0.000000e+00> : vector<8x8xf32>
    %32 = tpu.matmul %31, %18, %cst_19 {dimension_numbers = #tpu.dot_dimension_numbers<[1], [0], [0], [1], [0, 0, 1, 1], [], []>} : vector<8x8xf32>, vector<8x8xf32>, vector<8x8xf32> -> vector<8x8xf32>
    %c0_20 = arith.constant 0 : index
    %c0_21 = arith.constant 0 : index
    %33 = vector.load %arg19[%c0_20, %c0_21] : memref<16x32xf32, #tpu.memory_space<vmem>>, vector<8x8xf32>
    tpu.vector_store %arg19[%c0_20, %c0_21], %32 {strides = array<i32>} : memref<16x32xf32, #tpu.memory_space<vmem>>, vector<8x8xf32>,
    %34 = vector.extract_strided_slice %5 {offsets = [0, 8], sizes = [8, 8], strides = [1, 1]} : vector<16x32xf32> to vector<8x8xf32>
    %35 = vector.extract_strided_slice %10 {offsets = [0, 8], sizes = [8, 8], strides = [1, 1]} : vector<16x32xf32> to vector<8x8xf32>
    %36 = vector.extract_strided_slice %15 {offsets = [0, 8], sizes = [8, 8], strides = [1, 1]} : vector<16x32xf32> to vector<8x8xf32>
    %cst_22 = arith.constant dense<0.000000e+00> : vector<8x8xf32>
    %37 = tpu.matmul %34, %35, %cst_22 {dimension_numbers = #tpu.dot_dimension_numbers<[1], [1], [0], [0], [0, 0, 1, 0], [], []>} : vector<8x8xf32>, vector<8x8xf32>, vector<8x8xf32> -> vector<8x8xf32>
    %cst_23 = arith.constant 0.353553385 : f32
    %38 = vector.broadcast %cst_23 : f32 to vector<8x8xf32>
    %39 = arith.mulf %37, %38 : vector<8x8xf32>
    %cst_24 = arith.constant dense<0xFF800000> : vector<8xf32>
    %40 = vector.multi_reduction <maximumf>, %39, %cst_24 [1] : vector<8x8xf32> to vector<8xf32>
    %41 = vector.shape_cast %40 : vector<8xf32> to vector<8x1xf32>
    %42 = vector.broadcast %41 : vector<8x1xf32> to vector<8x8xf32>
    %43 = arith.subf %39, %42 : vector<8x8xf32>
    %44 = math.exp %43 : vector<8x8xf32>
    %cst_25 = arith.constant dense<0.000000e+00> : vector<8xf32>
    %45 = vector.multi_reduction <add>, %44, %cst_25 [1] : vector<8x8xf32> to vector<8xf32>
    %46 = vector.shape_cast %45 : vector<8xf32> to vector<8x1xf32>
    %47 = tpu.reciprocal %46 : vector<8x1xf32> -> vector<8x1xf32>
    %48 = vector.broadcast %47 : vector<8x1xf32> to vector<8x8xf32>
    %49 = arith.mulf %44, %48 : vector<8x8xf32>
    %cst_26 = arith.constant dense<0.000000e+00> : vector<8x8xf32>
    %50 = tpu.matmul %49, %36, %cst_26 {dimension_numbers = #tpu.dot_dimension_numbers<[1], [0], [0], [1], [0, 0, 1, 1], [], []>} : vector<8x8xf32>, vector<8x8xf32>, vector<8x8xf32> -> vector<8x8xf32>
    %c0_27 = arith.constant 0 : index
    %c8 = arith.constant 8 : index
    %51 = vector.load %arg19[%c0_27, %c8] : memref<16x32xf32, #tpu.memory_space<vmem>>, vector<8x8xf32>
    tpu.vector_store %arg19[%c0_27, %c8], %50 {strides = array<i32>} : memref<16x32xf32, #tpu.memory_space<vmem>>, vector<8x8xf32>,
    %52 = vector.extract_strided_slice %5 {offsets = [0, 16], sizes = [8, 8], strides = [1, 1]} : vector<16x32xf32> to vector<8x8xf32>
    %53 = vector.extract_strided_slice %10 {offsets = [0, 16], sizes = [8, 8], strides = [1, 1]} : vector<16x32xf32> to vector<8x8xf32>
    %54 = vector.extract_strided_slice %15 {offsets = [0, 16], sizes = [8, 8], strides = [1, 1]} : vector<16x32xf32> to vector<8x8xf32>
    %cst_28 = arith.constant dense<0.000000e+00> : vector<8x8xf32>
    %55 = tpu.matmul %52, %53, %cst_28 {dimension_numbers = #tpu.dot_dimension_numbers<[1], [1], [0], [0], [0, 0, 1, 0], [], []>} : vector<8x8xf32>, vector<8x8xf32>, vector<8x8xf32> -> vector<8x8xf32>
    %cst_29 = arith.constant 0.353553385 : f32
    %56 = vector.broadcast %cst_29 : f32 to vector<8x8xf32>
    %57 = arith.mulf %55, %56 : vector<8x8xf32>
    %cst_30 = arith.constant dense<0xFF800000> : vector<8xf32>
    %58 = vector.multi_reduction <maximumf>, %57, %cst_30 [1] : vector<8x8xf32> to vector<8xf32>
    %59 = vector.shape_cast %58 : vector<8xf32> to vector<8x1xf32>
    %60 = vector.broadcast %59 : vector<8x1xf32> to vector<8x8xf32>
    %61 = arith.subf %57, %60 : vector<8x8xf32>
    %62 = math.exp %61 : vector<8x8xf32>
    %cst_31 = arith.constant dense<0.000000e+00> : vector<8xf32>
    %63 = vector.multi_reduction <add>, %62, %cst_31 [1] : vector<8x8xf32> to vector<8xf32>
    %64 = vector.shape_cast %63 : vector<8xf32> to vector<8x1xf32>
    %65 = tpu.reciprocal %64 : vector<8x1xf32> -> vector<8x1xf32>
    %66 = vector.broadcast %65 : vector<8x1xf32> to vector<8x8xf32>
    %67 = arith.mulf %62, %66 : vector<8x8xf32>
    %cst_32 = arith.constant dense<0.000000e+00> : vector<8x8xf32>
    %68 = tpu.matmul %67, %54, %cst_32 {dimension_numbers = #tpu.dot_dimension_numbers<[1], [0], [0], [1], [0, 0, 1, 1], [], []>} : vector<8x8xf32>, vector<8x8xf32>, vector<8x8xf32> -> vector<8x8xf32>
    %c0_33 = arith.constant 0 : index
    %c16 = arith.constant 16 : index
    %69 = vector.load %arg19[%c0_33, %c16] : memref<16x32xf32, #tpu.memory_space<vmem>>, vector<8x8xf32>
    tpu.vector_store %arg19[%c0_33, %c16], %68 {strides = array<i32>} : memref<16x32xf32, #tpu.memory_space<vmem>>, vector<8x8xf32>,
    %70 = vector.extract_strided_slice %5 {offsets = [0, 24], sizes = [8, 8], strides = [1, 1]} : vector<16x32xf32> to vector<8x8xf32>
    %71 = vector.extract_strided_slice %10 {offsets = [0, 24], sizes = [8, 8], strides = [1, 1]} : vector<16x32xf32> to vector<8x8xf32>
    %72 = vector.extract_strided_slice %15 {offsets = [0, 24], sizes = [8, 8], strides = [1, 1]} : vector<16x32xf32> to vector<8x8xf32>
    %cst_34 = arith.constant dense<0.000000e+00> : vector<8x8xf32>
    %73 = tpu.matmul %70, %71, %cst_34 {dimension_numbers = #tpu.dot_dimension_numbers<[1], [1], [0], [0], [0, 0, 1, 0], [], []>} : vector<8x8xf32>, vector<8x8xf32>, vector<8x8xf32> -> vector<8x8xf32>
    %cst_35 = arith.constant 0.353553385 : f32
    %74 = vector.broadcast %cst_35 : f32 to vector<8x8xf32>
    %75 = arith.mulf %73, %74 : vector<8x8xf32>
    %cst_36 = arith.constant dense<0xFF800000> : vector<8xf32>
    %76 = vector.multi_reduction <maximumf>, %75, %cst_36 [1] : vector<8x8xf32> to vector<8xf32>
    %77 = vector.shape_cast %76 : vector<8xf32> to vector<8x1xf32>
    %78 = vector.broadcast %77 : vector<8x1xf32> to vector<8x8xf32>
    %79 = arith.subf %75, %78 : vector<8x8xf32>
    %80 = math.exp %79 : vector<8x8xf32>
    %cst_37 = arith.constant dense<0.000000e+00> : vector<8xf32>
    %81 = vector.multi_reduction <add>, %80, %cst_37 [1] : vector<8x8xf32> to vector<8xf32>
    %82 = vector.shape_cast %81 : vector<8xf32> to vector<8x1xf32>
    %83 = tpu.reciprocal %82 : vector<8x1xf32> -> vector<8x1xf32>
    %84 = vector.broadcast %83 : vector<8x1xf32> to vector<8x8xf32>
    %85 = arith.mulf %80, %84 : vector<8x8xf32>
    %cst_38 = arith.constant dense<0.000000e+00> : vector<8x8xf32>
    %86 = tpu.matmul %85, %72, %cst_38 {dimension_numbers = #tpu.dot_dimension_numbers<[1], [0], [0], [1], [0, 0, 1, 1], [], []>} : vector<8x8xf32>, vector<8x8xf32>, vector<8x8xf32> -> vector<8x8xf32>
    %c0_39 = arith.constant 0 : index
    %c24 = arith.constant 24 : index
    %87 = vector.load %arg19[%c0_39, %c24] : memref<16x32xf32, #tpu.memory_space<vmem>>, vector<8x8xf32>
    tpu.vector_store %arg19[%c0_39, %c24], %86 {strides = array<i32>} : memref<16x32xf32, #tpu.memory_space<vmem>>, vector<8x8xf32>,
    %88 = vector.extract_strided_slice %5 {offsets = [8, 0], sizes = [8, 8], strides = [1, 1]} : vector<16x32xf32> to vector<8x8xf32>
    %89 = vector.extract_strided_slice %10 {offsets = [8, 0], sizes = [8, 8], strides = [1, 1]} : vector<16x32xf32> to vector<8x8xf32>
    %90 = vector.extract_strided_slice %15 {offsets = [8, 0], sizes = [8, 8], strides = [1, 1]} : vector<16x32xf32> to vector<8x8xf32>
    %cst_40 = arith.constant dense<0.000000e+00> : vector<8x8xf32>
    %91 = tpu.matmul %88, %89, %cst_40 {dimension_numbers = #tpu.dot_dimension_numbers<[1], [1], [0], [0], [0, 0, 1, 0], [], []>} : vector<8x8xf32>, vector<8x8xf32>, vector<8x8xf32> -> vector<8x8xf32>
    %cst_41 = arith.constant 0.353553385 : f32
    %92 = vector.broadcast %cst_41 : f32 to vector<8x8xf32>
    %93 = arith.mulf %91, %92 : vector<8x8xf32>
    %cst_42 = arith.constant dense<0xFF800000> : vector<8xf32>
    %94 = vector.multi_reduction <maximumf>, %93, %cst_42 [1] : vector<8x8xf32> to vector<8xf32>
    %95 = vector.shape_cast %94 : vector<8xf32> to vector<8x1xf32>
    %96 = vector.broadcast %95 : vector<8x1xf32> to vector<8x8xf32>
    %97 = arith.subf %93, %96 : vector<8x8xf32>
    %98 = math.exp %97 : vector<8x8xf32>
    %cst_43 = arith.constant dense<0.000000e+00> : vector<8xf32>
    %99 = vector.multi_reduction <add>, %98, %cst_43 [1] : vector<8x8xf32> to vector<8xf32>
    %100 = vector.shape_cast %99 : vector<8xf32> to vector<8x1xf32>
    %101 = tpu.reciprocal %100 : vector<8x1xf32> -> vector<8x1xf32>
    %102 = vector.broadcast %101 : vector<8x1xf32> to vector<8x8xf32>
    %103 = arith.mulf %98, %102 : vector<8x8xf32>
    %cst_44 = arith.constant dense<0.000000e+00> : vector<8x8xf32>
    %104 = tpu.matmul %103, %90, %cst_44 {dimension_numbers = #tpu.dot_dimension_numbers<[1], [0], [0], [1], [0, 0, 1, 1], [], []>} : vector<8x8xf32>, vector<8x8xf32>, vector<8x8xf32> -> vector<8x8xf32>
    %c8_45 = arith.constant 8 : index
    %c0_46 = arith.constant 0 : index
    %105 = vector.load %arg19[%c8_45, %c0_46] : memref<16x32xf32, #tpu.memory_space<vmem>>, vector<8x8xf32>
    tpu.vector_store %arg19[%c8_45, %c0_46], %104 {strides = array<i32>} : memref<16x32xf32, #tpu.memory_space<vmem>>, vector<8x8xf32>,
    %106 = vector.extract_strided_slice %5 {offsets = [8, 8], sizes = [8, 8], strides = [1, 1]} : vector<16x32xf32> to vector<8x8xf32>
    %107 = vector.extract_strided_slice %10 {offsets = [8, 8], sizes = [8, 8], strides = [1, 1]} : vector<16x32xf32> to vector<8x8xf32>
    %108 = vector.extract_strided_slice %15 {offsets = [8, 8], sizes = [8, 8], strides = [1, 1]} : vector<16x32xf32> to vector<8x8xf32>
    %cst_47 = arith.constant dense<0.000000e+00> : vector<8x8xf32>
    %109 = tpu.matmul %106, %107, %cst_47 {dimension_numbers = #tpu.dot_dimension_numbers<[1], [1], [0], [0], [0, 0, 1, 0], [], []>} : vector<8x8xf32>, vector<8x8xf32>, vector<8x8xf32> -> vector<8x8xf32>
    %cst_48 = arith.constant 0.353553385 : f32
    %110 = vector.broadcast %cst_48 : f32 to vector<8x8xf32>
    %111 = arith.mulf %109, %110 : vector<8x8xf32>
    %cst_49 = arith.constant dense<0xFF800000> : vector<8xf32>
    %112 = vector.multi_reduction <maximumf>, %111, %cst_49 [1] : vector<8x8xf32> to vector<8xf32>
    %113 = vector.shape_cast %112 : vector<8xf32> to vector<8x1xf32>
    %114 = vector.broadcast %113 : vector<8x1xf32> to vector<8x8xf32>
    %115 = arith.subf %111, %114 : vector<8x8xf32>
    %116 = math.exp %115 : vector<8x8xf32>
    %cst_50 = arith.constant dense<0.000000e+00> : vector<8xf32>
    %117 = vector.multi_reduction <add>, %116, %cst_50 [1] : vector<8x8xf32> to vector<8xf32>
    %118 = vector.shape_cast %117 : vector<8xf32> to vector<8x1xf32>
    %119 = tpu.reciprocal %118 : vector<8x1xf32> -> vector<8x1xf32>
    %120 = vector.broadcast %119 : vector<8x1xf32> to vector<8x8xf32>
    %121 = arith.mulf %116, %120 : vector<8x8xf32>
    %cst_51 = arith.constant dense<0.000000e+00> : vector<8x8xf32>
    %122 = tpu.matmul %121, %108, %cst_51 {dimension_numbers = #tpu.dot_dimension_numbers<[1], [0], [0], [1], [0, 0, 1, 1], [], []>} : vector<8x8xf32>, vector<8x8xf32>, vector<8x8xf32> -> vector<8x8xf32>
    %c8_52 = arith.constant 8 : index
    %c8_53 = arith.constant 8 : index
    %123 = vector.load %arg19[%c8_52, %c8_53] : memref<16x32xf32, #tpu.memory_space<vmem>>, vector<8x8xf32>
    tpu.vector_store %arg19[%c8_52, %c8_53], %122 {strides = array<i32>} : memref<16x32xf32, #tpu.memory_space<vmem>>, vector<8x8xf32>,
    %124 = vector.extract_strided_slice %5 {offsets = [8, 16], sizes = [8, 8], strides = [1, 1]} : vector<16x32xf32> to vector<8x8xf32>
    %125 = vector.extract_strided_slice %10 {offsets = [8, 16], sizes = [8, 8], strides = [1, 1]} : vector<16x32xf32> to vector<8x8xf32>
    %126 = vector.extract_strided_slice %15 {offsets = [8, 16], sizes = [8, 8], strides = [1, 1]} : vector<16x32xf32> to vector<8x8xf32>
    %cst_54 = arith.constant dense<0.000000e+00> : vector<8x8xf32>
    %127 = tpu.matmul %124, %125, %cst_54 {dimension_numbers = #tpu.dot_dimension_numbers<[1], [1], [0], [0], [0, 0, 1, 0], [], []>} : vector<8x8xf32>, vector<8x8xf32>, vector<8x8xf32> -> vector<8x8xf32>
    %cst_55 = arith.constant 0.353553385 : f32
    %128 = vector.broadcast %cst_55 : f32 to vector<8x8xf32>
    %129 = arith.mulf %127, %128 : vector<8x8xf32>
    %cst_56 = arith.constant dense<0xFF800000> : vector<8xf32>
    %130 = vector.multi_reduction <maximumf>, %129, %cst_56 [1] : vector<8x8xf32> to vector<8xf32>
    %131 = vector.shape_cast %130 : vector<8xf32> to vector<8x1xf32>
    %132 = vector.broadcast %131 : vector<8x1xf32> to vector<8x8xf32>
    %133 = arith.subf %129, %132 : vector<8x8xf32>
    %134 = math.exp %133 : vector<8x8xf32>
    %cst_57 = arith.constant dense<0.000000e+00> : vector<8xf32>
    %135 = vector.multi_reduction <add>, %134, %cst_57 [1] : vector<8x8xf32> to vector<8xf32>
    %136 = vector.shape_cast %135 : vector<8xf32> to vector<8x1xf32>
    %137 = tpu.reciprocal %136 : vector<8x1xf32> -> vector<8x1xf32>
    %138 = vector.broadcast %137 : vector<8x1xf32> to vector<8x8xf32>
    %139 = arith.mulf %134, %138 : vector<8x8xf32>
    %cst_58 = arith.constant dense<0.000000e+00> : vector<8x8xf32>
    %140 = tpu.matmul %139, %126, %cst_58 {dimension_numbers = #tpu.dot_dimension_numbers<[1], [0], [0], [1], [0, 0, 1, 1], [], []>} : vector<8x8xf32>, vector<8x8xf32>, vector<8x8xf32> -> vector<8x8xf32>
    %c8_59 = arith.constant 8 : index
    %c16_60 = arith.constant 16 : index
    %141 = vector.load %arg19[%c8_59, %c16_60] : memref<16x32xf32, #tpu.memory_space<vmem>>, vector<8x8xf32>
    tpu.vector_store %arg19[%c8_59, %c16_60], %140 {strides = array<i32>} : memref<16x32xf32, #tpu.memory_space<vmem>>, vector<8x8xf32>,
    %142 = vector.extract_strided_slice %5 {offsets = [8, 24], sizes = [8, 8], strides = [1, 1]} : vector<16x32xf32> to vector<8x8xf32>
    %143 = vector.extract_strided_slice %10 {offsets = [8, 24], sizes = [8, 8], strides = [1, 1]} : vector<16x32xf32> to vector<8x8xf32>
    %144 = vector.extract_strided_slice %15 {offsets = [8, 24], sizes = [8, 8], strides = [1, 1]} : vector<16x32xf32> to vector<8x8xf32>
    %cst_61 = arith.constant dense<0.000000e+00> : vector<8x8xf32>
    %145 = tpu.matmul %142, %143, %cst_61 {dimension_numbers = #tpu.dot_dimension_numbers<[1], [1], [0], [0], [0, 0, 1, 0], [], []>} : vector<8x8xf32>, vector<8x8xf32>, vector<8x8xf32> -> vector<8x8xf32>
    %cst_62 = arith.constant 0.353553385 : f32
    %146 = vector.broadcast %cst_62 : f32 to vector<8x8xf32>
    %147 = arith.mulf %145, %146 : vector<8x8xf32>
    %cst_63 = arith.constant dense<0xFF800000> : vector<8xf32>
    %148 = vector.multi_reduction <maximumf>, %147, %cst_63 [1] : vector<8x8xf32> to vector<8xf32>
    %149 = vector.shape_cast %148 : vector<8xf32> to vector<8x1xf32>
    %150 = vector.broadcast %149 : vector<8x1xf32> to vector<8x8xf32>
    %151 = arith.subf %147, %150 : vector<8x8xf32>
    %152 = math.exp %151 : vector<8x8xf32>
    %cst_64 = arith.constant dense<0.000000e+00> : vector<8xf32>
    %153 = vector.multi_reduction <add>, %152, %cst_64 [1] : vector<8x8xf32> to vector<8xf32>
    %154 = vector.shape_cast %153 : vector<8xf32> to vector<8x1xf32>
    %155 = tpu.reciprocal %154 : vector<8x1xf32> -> vector<8x1xf32>
    %156 = vector.broadcast %155 : vector<8x1xf32> to vector<8x8xf32>
    %157 = arith.mulf %152, %156 : vector<8x8xf32>
    %cst_65 = arith.constant dense<0.000000e+00> : vector<8x8xf32>
    %158 = tpu.matmul %157, %144, %cst_65 {dimension_numbers = #tpu.dot_dimension_numbers<[1], [0], [0], [1], [0, 0, 1, 1], [], []>} : vector<8x8xf32>, vector<8x8xf32>, vector<8x8xf32> -> vector<8x8xf32>
    %c8_66 = arith.constant 8 : index
    %c24_67 = arith.constant 24 : index
    %159 = vector.load %arg19[%c8_66, %c24_67] : memref<16x32xf32, #tpu.memory_space<vmem>>, vector<8x8xf32>
    tpu.vector_store %arg19[%c8_66, %c24_67], %158 {strides = array<i32>} : memref<16x32xf32, #tpu.memory_space<vmem>>, vector<8x8xf32>,
    %c0_68 = arith.constant 0 : index
    %c0_69 = arith.constant 0 : index
    %160 = vector.load %arg19[%c0_68, %c0_69] : memref<16x32xf32, #tpu.memory_space<vmem>>, vector<16x32xf32>
    %c0_70 = arith.constant 0 : index
    %c0_71 = arith.constant 0 : index
    %161 = vector.load %arg8[%c0_70, %c0_71] : memref<32x32xf32, #tpu.memory_space<vmem>>, vector<32x32xf32>
    %cst_72 = arith.constant dense<0.000000e+00> : vector<16x32xf32>
    %162 = tpu.matmul %160, %161, %cst_72 {dimension_numbers = #tpu.dot_dimension_numbers<[1], [0], [0], [1], [0, 0, 1, 1], [], []>} : vector<16x32xf32>, vector<32x32xf32>, vector<16x32xf32> -> vector<16x32xf32>
    %c0_73 = arith.constant 0 : index
    %c0_74 = arith.constant 0 : index
    %163 = vector.load %arg9[%c0_73, %c0_74] : memref<1x32xf32, #tpu.memory_space<vmem>>, vector<1x32xf32>
    %164 = vector.broadcast %163 : vector<1x32xf32> to vector<16x32xf32>
    %165 = arith.addf %162, %164 : vector<16x32xf32>
    %166 = arith.addf %0, %165 : vector<16x32xf32>
    %c0_75 = arith.constant 0 : index
    %c0_76 = arith.constant 0 : index
    %167 = vector.load %arg10[%c0_75, %c0_76] : memref<16x32xf32, #tpu.memory_space<vmem>>, vector<16x32xf32>
    %c0_77 = arith.constant 0 : index
    %c0_78 = arith.constant 0 : index
    %168 = vector.load %arg11[%c0_77, %c0_78] : memref<16x32xf32, #tpu.memory_space<vmem>>, vector<16x32xf32>
    %169 = vector.extract_strided_slice %166 {offsets = [0, 0], sizes = [8, 32], strides = [1, 1]} : vector<16x32xf32> to vector<8x32xf32>
    %170 = vector.shape_cast %169 : vector<8x32xf32> to vector<1x8x32xf32>
    %cst_79 = arith.constant dense<0.000000e+00> : vector<1xf32>
    %171 = vector.multi_reduction <add>, %170, %cst_79 [1, 2] : vector<1x8x32xf32> to vector<1xf32>
    %172 = vector.shape_cast %171 : vector<1xf32> to vector<1x1x1xf32>
    %173 = vector.extract %172[0, 0, 0] : f32 from vector<1x1x1xf32>
    %174 = vector.broadcast %173 : f32 to vector<1x1xf32>
    %175 = arith.mulf %169, %169 : vector<8x32xf32>
    %176 = vector.shape_cast %175 : vector<8x32xf32> to vector<1x8x32xf32>
    %cst_80 = arith.constant dense<0.000000e+00> : vector<1xf32>
    %177 = vector.multi_reduction <add>, %176, %cst_80 [1, 2] : vector<1x8x32xf32> to vector<1xf32>
    %178 = vector.shape_cast %177 : vector<1xf32> to vector<1x1x1xf32>
    %179 = vector.extract %178[0, 0, 0] : f32 from vector<1x1x1xf32>
    %180 = vector.broadcast %179 : f32 to vector<1x1xf32>
    %cst_81 = arith.constant 3.906250e-03 : f32
    %181 = vector.broadcast %cst_81 : f32 to vector<1x1xf32>
    %182 = arith.mulf %174, %181 : vector<1x1xf32>
    %cst_82 = arith.constant 3.906250e-03 : f32
    %183 = vector.broadcast %cst_82 : f32 to vector<1x1xf32>
    %184 = arith.mulf %180, %183 : vector<1x1xf32>
    %185 = arith.mulf %182, %182 : vector<1x1xf32>
    %186 = arith.subf %184, %185 : vector<1x1xf32>
    %187 = vector.broadcast %182 : vector<1x1xf32> to vector<8x32xf32>
    %188 = arith.subf %169, %187 : vector<8x32xf32>
    %cst_83 = arith.constant 9.99999974E-6 : f32
    %189 = vector.broadcast %cst_83 : f32 to vector<1x1xf32>
    %190 = arith.addf %186, %189 : vector<1x1xf32>
    %191 = math.rsqrt %190 : vector<1x1xf32>
    %192 = vector.broadcast %191 : vector<1x1xf32> to vector<8x32xf32>
    %193 = arith.mulf %188, %192 : vector<8x32xf32>
    %194 = vector.extract_strided_slice %166 {offsets = [8, 0], sizes = [8, 32], strides = [1, 1]} : vector<16x32xf32> to vector<8x32xf32>
    %195 = vector.shape_cast %194 : vector<8x32xf32> to vector<1x8x32xf32>
    %cst_84 = arith.constant dense<0.000000e+00> : vector<1xf32>
    %196 = vector.multi_reduction <add>, %195, %cst_84 [1, 2] : vector<1x8x32xf32> to vector<1xf32>
    %197 = vector.shape_cast %196 : vector<1xf32> to vector<1x1x1xf32>
    %198 = vector.extract %197[0, 0, 0] : f32 from vector<1x1x1xf32>
    %199 = vector.broadcast %198 : f32 to vector<1x1xf32>
    %200 = arith.mulf %194, %194 : vector<8x32xf32>
    %201 = vector.shape_cast %200 : vector<8x32xf32> to vector<1x8x32xf32>
    %cst_85 = arith.constant dense<0.000000e+00> : vector<1xf32>
    %202 = vector.multi_reduction <add>, %201, %cst_85 [1, 2] : vector<1x8x32xf32> to vector<1xf32>
    %203 = vector.shape_cast %202 : vector<1xf32> to vector<1x1x1xf32>
    %204 = vector.extract %203[0, 0, 0] : f32 from vector<1x1x1xf32>
    %205 = vector.broadcast %204 : f32 to vector<1x1xf32>
    %cst_86 = arith.constant 3.906250e-03 : f32
    %206 = vector.broadcast %cst_86 : f32 to vector<1x1xf32>
    %207 = arith.mulf %199, %206 : vector<1x1xf32>
    %cst_87 = arith.constant 3.906250e-03 : f32
    %208 = vector.broadcast %cst_87 : f32 to vector<1x1xf32>
    %209 = arith.mulf %205, %208 : vector<1x1xf32>
    %210 = arith.mulf %207, %207 : vector<1x1xf32>
    %211 = arith.subf %209, %210 : vector<1x1xf32>
    %212 = vector.broadcast %207 : vector<1x1xf32> to vector<8x32xf32>
    %213 = arith.subf %194, %212 : vector<8x32xf32>
    %cst_88 = arith.constant 9.99999974E-6 : f32
    %214 = vector.broadcast %cst_88 : f32 to vector<1x1xf32>
    %215 = arith.addf %211, %214 : vector<1x1xf32>
    %216 = math.rsqrt %215 : vector<1x1xf32>
    %217 = vector.broadcast %216 : vector<1x1xf32> to vector<8x32xf32>
    %218 = arith.mulf %213, %217 : vector<8x32xf32>
    %219 = tpu.concatenate %193, %218 in 0 : vector<8x32xf32>, vector<8x32xf32> -> vector<16x32xf32>
    %220 = arith.mulf %219, %167 : vector<16x32xf32>
    %221 = arith.addf %220, %168 : vector<16x32xf32>
    %c0_89 = arith.constant 0 : index
    %c0_90 = arith.constant 0 : index
    %222 = vector.load %arg12[%c0_89, %c0_90] : memref<32x128xf32, #tpu.memory_space<vmem>>, vector<32x128xf32>
    %cst_91 = arith.constant dense<0.000000e+00> : vector<16x128xf32>
    %223 = tpu.matmul %221, %222, %cst_91 {dimension_numbers = #tpu.dot_dimension_numbers<[1], [0], [0], [1], [0, 0, 1, 1], [], []>} : vector<16x32xf32>, vector<32x128xf32>, vector<16x128xf32> -> vector<16x128xf32>
    %c0_92 = arith.constant 0 : index
    %c0_93 = arith.constant 0 : index
    %224 = vector.load %arg13[%c0_92, %c0_93] : memref<1x128xf32, #tpu.memory_space<vmem>>, vector<1x128xf32>
    %225 = vector.broadcast %224 : vector<1x128xf32> to vector<16x128xf32>
    %226 = arith.addf %223, %225 : vector<16x128xf32>
    %cst_94 = arith.constant 0.000000e+00 : f32
    %227 = vector.broadcast %cst_94 : f32 to vector<16x128xf32>
    %228 = arith.maximumf %226, %227 : vector<16x128xf32>
    %c0_95 = arith.constant 0 : index
    %c0_96 = arith.constant 0 : index
    %229 = vector.load %arg14[%c0_95, %c0_96] : memref<128x32xf32, #tpu.memory_space<vmem>>, vector<128x32xf32>
    %cst_97 = arith.constant dense<0.000000e+00> : vector<16x32xf32>
    %230 = tpu.matmul %228, %229, %cst_97 {dimension_numbers = #tpu.dot_dimension_numbers<[1], [0], [0], [1], [0, 0, 1, 1], [], []>} : vector<16x128xf32>, vector<128x32xf32>, vector<16x32xf32> -> vector<16x32xf32>
    %c0_98 = arith.constant 0 : index
    %c0_99 = arith.constant 0 : index
    %231 = vector.load %arg15[%c0_98, %c0_99] : memref<1x32xf32, #tpu.memory_space<vmem>>, vector<1x32xf32>
    %232 = vector.broadcast %231 : vector<1x32xf32> to vector<16x32xf32>
    %233 = arith.addf %230, %232 : vector<16x32xf32>
    %cst_100 = arith.constant 0.000000e+00 : f32
    %234 = vector.broadcast %cst_100 : f32 to vector<16x32xf32>
    %235 = arith.maximumf %233, %234 : vector<16x32xf32>
    %236 = arith.addf %235, %166 : vector<16x32xf32>
    %c0_101 = arith.constant 0 : index
    %c0_102 = arith.constant 0 : index
    %237 = vector.load %arg16[%c0_101, %c0_102] : memref<16x32xf32, #tpu.memory_space<vmem>>, vector<16x32xf32>
    %c0_103 = arith.constant 0 : index
    %c0_104 = arith.constant 0 : index
    %238 = vector.load %arg17[%c0_103, %c0_104] : memref<16x32xf32, #tpu.memory_space<vmem>>, vector<16x32xf32>
    %239 = vector.extract_strided_slice %236 {offsets = [0, 0], sizes = [8, 32], strides = [1, 1]} : vector<16x32xf32> to vector<8x32xf32>
    %240 = vector.shape_cast %239 : vector<8x32xf32> to vector<1x8x32xf32>
    %cst_105 = arith.constant dense<0.000000e+00> : vector<1xf32>
    %241 = vector.multi_reduction <add>, %240, %cst_105 [1, 2] : vector<1x8x32xf32> to vector<1xf32>
    %242 = vector.shape_cast %241 : vector<1xf32> to vector<1x1x1xf32>
    %243 = vector.extract %242[0, 0, 0] : f32 from vector<1x1x1xf32>
    %244 = vector.broadcast %243 : f32 to vector<1x1xf32>
    %245 = arith.mulf %239, %239 : vector<8x32xf32>
    %246 = vector.shape_cast %245 : vector<8x32xf32> to vector<1x8x32xf32>
    %cst_106 = arith.constant dense<0.000000e+00> : vector<1xf32>
    %247 = vector.multi_reduction <add>, %246, %cst_106 [1, 2] : vector<1x8x32xf32> to vector<1xf32>
    %248 = vector.shape_cast %247 : vector<1xf32> to vector<1x1x1xf32>
    %249 = vector.extract %248[0, 0, 0] : f32 from vector<1x1x1xf32>
    %250 = vector.broadcast %249 : f32 to vector<1x1xf32>
    %cst_107 = arith.constant 3.906250e-03 : f32
    %251 = vector.broadcast %cst_107 : f32 to vector<1x1xf32>
    %252 = arith.mulf %244, %251 : vector<1x1xf32>
    %cst_108 = arith.constant 3.906250e-03 : f32
    %253 = vector.broadcast %cst_108 : f32 to vector<1x1xf32>
    %254 = arith.mulf %250, %253 : vector<1x1xf32>
    %255 = arith.mulf %252, %252 : vector<1x1xf32>
    %256 = arith.subf %254, %255 : vector<1x1xf32>
    %257 = vector.broadcast %252 : vector<1x1xf32> to vector<8x32xf32>
    %258 = arith.subf %239, %257 : vector<8x32xf32>
    %cst_109 = arith.constant 9.99999974E-6 : f32
    %259 = vector.broadcast %cst_109 : f32 to vector<1x1xf32>
    %260 = arith.addf %256, %259 : vector<1x1xf32>
    %261 = math.rsqrt %260 : vector<1x1xf32>
    %262 = vector.broadcast %261 : vector<1x1xf32> to vector<8x32xf32>
    %263 = arith.mulf %258, %262 : vector<8x32xf32>
    %264 = vector.extract_strided_slice %236 {offsets = [8, 0], sizes = [8, 32], strides = [1, 1]} : vector<16x32xf32> to vector<8x32xf32>
    %265 = vector.shape_cast %264 : vector<8x32xf32> to vector<1x8x32xf32>
    %cst_110 = arith.constant dense<0.000000e+00> : vector<1xf32>
    %266 = vector.multi_reduction <add>, %265, %cst_110 [1, 2] : vector<1x8x32xf32> to vector<1xf32>
    %267 = vector.shape_cast %266 : vector<1xf32> to vector<1x1x1xf32>
    %268 = vector.extract %267[0, 0, 0] : f32 from vector<1x1x1xf32>
    %269 = vector.broadcast %268 : f32 to vector<1x1xf32>
    %270 = arith.mulf %264, %264 : vector<8x32xf32>
    %271 = vector.shape_cast %270 : vector<8x32xf32> to vector<1x8x32xf32>
    %cst_111 = arith.constant dense<0.000000e+00> : vector<1xf32>
    %272 = vector.multi_reduction <add>, %271, %cst_111 [1, 2] : vector<1x8x32xf32> to vector<1xf32>
    %273 = vector.shape_cast %272 : vector<1xf32> to vector<1x1x1xf32>
    %274 = vector.extract %273[0, 0, 0] : f32 from vector<1x1x1xf32>
    %275 = vector.broadcast %274 : f32 to vector<1x1xf32>
    %cst_112 = arith.constant 3.906250e-03 : f32
    %276 = vector.broadcast %cst_112 : f32 to vector<1x1xf32>
    %277 = arith.mulf %269, %276 : vector<1x1xf32>
    %cst_113 = arith.constant 3.906250e-03 : f32
    %278 = vector.broadcast %cst_113 : f32 to vector<1x1xf32>
    %279 = arith.mulf %275, %278 : vector<1x1xf32>
    %280 = arith.mulf %277, %277 : vector<1x1xf32>
    %281 = arith.subf %279, %280 : vector<1x1xf32>
    %282 = vector.broadcast %277 : vector<1x1xf32> to vector<8x32xf32>
    %283 = arith.subf %264, %282 : vector<8x32xf32>
    %cst_114 = arith.constant 9.99999974E-6 : f32
    %284 = vector.broadcast %cst_114 : f32 to vector<1x1xf32>
    %285 = arith.addf %281, %284 : vector<1x1xf32>
    %286 = math.rsqrt %285 : vector<1x1xf32>
    %287 = vector.broadcast %286 : vector<1x1xf32> to vector<8x32xf32>
    %288 = arith.mulf %283, %287 : vector<8x32xf32>
    %289 = tpu.concatenate %263, %288 in 0 : vector<8x32xf32>, vector<8x32xf32> -> vector<16x32xf32>
    %290 = arith.mulf %289, %237 : vector<16x32xf32>
    %291 = arith.addf %290, %238 : vector<16x32xf32>
    %c0_115 = arith.constant 0 : index
    %c0_116 = arith.constant 0 : index
    %292 = vector.load %arg18[%c0_115, %c0_116] : memref<16x32xf32, #tpu.memory_space<vmem>>, vector<16x32xf32>
    tpu.vector_store %arg18[%c0_115, %c0_116], %291 {strides = array<i32>} : memref<16x32xf32, #tpu.memory_space<vmem>>, vector<16x32xf32>,
    return
  }
  func.func @transform_0(%arg0: i32) -> (i32, i32) {
    %c0_i32 = arith.constant 0 : i32
    %c0_i32_0 = arith.constant 0 : i32
    return %arg0, %c0_i32 : i32, i32
  }
  func.func @transform_1(%arg0: i32) -> (i32, i32) {
    %c0_i32 = arith.constant 0 : i32
    %c0_i32_0 = arith.constant 0 : i32
    %c0_i32_1 = arith.constant 0 : i32
    return %c0_i32, %c0_i32_0 : i32, i32
  }
  func.func @transform_2(%arg0: i32) -> (i32, i32) {
    %c0_i32 = arith.constant 0 : i32
    %c0_i32_0 = arith.constant 0 : i32
    %c0_i32_1 = arith.constant 0 : i32
    return %c0_i32, %c0_i32_0 : i32, i32
  }
  func.func @transform_3(%arg0: i32) -> (i32, i32) {
    %c0_i32 = arith.constant 0 : i32
    %c0_i32_0 = arith.constant 0 : i32
    %c0_i32_1 = arith.constant 0 : i32
    return %c0_i32, %c0_i32_0 : i32, i32
  }
  func.func @transform_4(%arg0: i32) -> (i32, i32) {
    %c0_i32 = arith.constant 0 : i32
    %c0_i32_0 = arith.constant 0 : i32
    %c0_i32_1 = arith.constant 0 : i32
    return %c0_i32, %c0_i32_0 : i32, i32
  }
  func.func @transform_5(%arg0: i32) -> (i32, i32) {
    %c0_i32 = arith.constant 0 : i32
    %c0_i32_0 = arith.constant 0 : i32
    %c0_i32_1 = arith.constant 0 : i32
    return %c0_i32, %c0_i32_0 : i32, i32
  }
  func.func @transform_6(%arg0: i32) -> (i32, i32) {
    %c0_i32 = arith.constant 0 : i32
    %c0_i32_0 = arith.constant 0 : i32
    %c0_i32_1 = arith.constant 0 : i32
    return %c0_i32, %c0_i32_0 : i32, i32
  }
  func.func @transform_7(%arg0: i32) -> (i32, i32) {
    %c0_i32 = arith.constant 0 : i32
    %c0_i32_0 = arith.constant 0 : i32
    %c0_i32_1 = arith.constant 0 : i32
    return %c0_i32, %c0_i32_0 : i32, i32
  }
  func.func @transform_8(%arg0: i32) -> (i32, i32) {
    %c0_i32 = arith.constant 0 : i32
    %c0_i32_0 = arith.constant 0 : i32
    %c0_i32_1 = arith.constant 0 : i32
    return %c0_i32, %c0_i32_0 : i32, i32
  }
  func.func @transform_9(%arg0: i32) -> (i32, i32) {
    %c0_i32 = arith.constant 0 : i32
    %c0_i32_0 = arith.constant 0 : i32
    %c0_i32_1 = arith.constant 0 : i32
    return %c0_i32, %c0_i32_0 : i32, i32
  }
  func.func @transform_10(%arg0: i32) -> (i32, i32) {
    %c0_i32 = arith.constant 0 : i32
    %c0_i32_0 = arith.constant 0 : i32
    %c0_i32_1 = arith.constant 0 : i32
    return %c0_i32, %c0_i32_0 : i32, i32
  }
  func.func @transform_11(%arg0: i32) -> (i32, i32) {
    %c0_i32 = arith.constant 0 : i32
    %c0_i32_0 = arith.constant 0 : i32
    %c0_i32_1 = arith.constant 0 : i32
    return %c0_i32, %c0_i32_0 : i32, i32
  }
  func.func @transform_12(%arg0: i32) -> (i32, i32) {
    %c0_i32 = arith.constant 0 : i32
    %c0_i32_0 = arith.constant 0 : i32
    %c0_i32_1 = arith.constant 0 : i32
    return %c0_i32, %c0_i32_0 : i32, i32
  }
  func.func @transform_13(%arg0: i32) -> (i32, i32) {
    %c0_i32 = arith.constant 0 : i32
    %c0_i32_0 = arith.constant 0 : i32
    %c0_i32_1 = arith.constant 0 : i32
    return %c0_i32, %c0_i32_0 : i32, i32
  }
  func.func @transform_14(%arg0: i32) -> (i32, i32) {
    %c0_i32 = arith.constant 0 : i32
    %c0_i32_0 = arith.constant 0 : i32
    %c0_i32_1 = arith.constant 0 : i32
    return %c0_i32, %c0_i32_0 : i32, i32
  }
  func.func @transform_15(%arg0: i32) -> (i32, i32) {
    %c0_i32 = arith.constant 0 : i32
    %c0_i32_0 = arith.constant 0 : i32
    %c0_i32_1 = arith.constant 0 : i32
    return %c0_i32, %c0_i32_0 : i32, i32
  }
  func.func @transform_16(%arg0: i32) -> (i32, i32) {
    %c0_i32 = arith.constant 0 : i32
    %c0_i32_0 = arith.constant 0 : i32
    %c0_i32_1 = arith.constant 0 : i32
    return %c0_i32, %c0_i32_0 : i32, i32
  }
  func.func @transform_17(%arg0: i32) -> (i32, i32) {
    %c0_i32 = arith.constant 0 : i32
    %c0_i32_0 = arith.constant 0 : i32
    return %arg0, %c0_i32 : i32, i32
  }
}

</mosaic_0001>

<llo_original>
// kernel: transformer_encoder_block.1
$region0: #{transformer_encoder_block.1}
  #allocation0 [shape = 'u32[]', space=smem, size = 0x4, offset = 0x4, fixed_abs, tag = 'smem constant byte address 0x4 - core index']
  #allocation1 [shape = 'u32[144,128]{1,0:T(1,128)}', space=vmem, size = 0x12000, scoped, tag = 'internal scratch']
  #allocation2 [shape = 'f32[16,32]{1,0:T(8,128)}', space=vmem, size = 0x2000, scoped, tag = 'scratch operand']
  %s0 = inlined_call_operand.vmem [shape: f32[16,32], index: 0, kind: input, shape index: {}]
  %s1 = inlined_call_operand.vmem [shape: f32[32,32], index: 1, kind: input, shape index: {}]
  %s2 = inlined_call_operand.vmem [shape: f32[32,32], index: 2, kind: input, shape index: {}]
  %s3 = inlined_call_operand.vmem [shape: f32[32,32], index: 3, kind: input, shape index: {}]
  %s4 = inlined_call_operand.vmem [shape: f32[1,32], index: 4, kind: input, shape index: {}]
  %s5 = inlined_call_operand.vmem [shape: f32[1,32], index: 5, kind: input, shape index: {}]
  %s6 = inlined_call_operand.vmem [shape: f32[1,32], index: 6, kind: input, shape index: {}]
  %s7 = inlined_call_operand.vmem [shape: f32[32,32], index: 7, kind: input, shape index: {}]
  %s8 = inlined_call_operand.vmem [shape: f32[1,32], index: 8, kind: input, shape index: {}]
  %s9 = inlined_call_operand.vmem [shape: f32[16,32], index: 9, kind: input, shape index: {}]
  %s10 = inlined_call_operand.vmem [shape: f32[16,32], index: 10, kind: input, shape index: {}]
  %s11 = inlined_call_operand.vmem [shape: f32[32,128], index: 11, kind: input, shape index: {}]
  %s12 = inlined_call_operand.vmem [shape: f32[1,128], index: 12, kind: input, shape index: {}]
  %s13 = inlined_call_operand.vmem [shape: f32[128,32], index: 13, kind: input, shape index: {}]
  %s14 = inlined_call_operand.vmem [shape: f32[1,32], index: 14, kind: input, shape index: {}]
  %s15 = inlined_call_operand.vmem [shape: f32[16,32], index: 15, kind: input, shape index: {}]
  %s16 = inlined_call_operand.vmem [shape: f32[16,32], index: 16, kind: input, shape index: {}]
  %s17 = inlined_call_operand.hbm [shape: f32[16,32], index: 17, kind: output, shape index: {}]
  %s18 = sld [smem:[#allocation0]]
  $region78: #{transformer_encoder_block.1} parent=0
    _
  %s20 = ssub.s32 1, %s18
  %s21 = scalar_select 0, %s20, %s18
  $region1: #{transformer_encoder_block.1} parent=0
    #allocation3 [shape = 'u8[8192]{0}', space=vmem, size = 0x2000, scoped, tag = 'output window, operand 0, single buffered']
    #allocation4 [shape = 's32[1]{0}', space=sflag, size = 0x4, scoped, tag = 'scoped memory for transformer_encoder_block.1']
    %22 = vsyncpa [#allocation4], 0
    // Predicated region
    $region2: #{transformer_encoder_block.1} parent=1 // pred_check
      _
    $region3: #{transformer_encoder_block.1} parent=1 // pred_check_branch
      %24 = sbr.rel (0) target = $region5
    $region4: #{transformer_encoder_block.1} parent=1 // pred_region
      _
    $region5: #{transformer_encoder_block.1} parent=1 // pred_fallthru
      _
    // Predicated region
    $region6: #{transformer_encoder_block.1} parent=1 // pred_check
      _
    $region7: #{transformer_encoder_block.1} parent=1 // pred_check_branch
      %26 = sbr.rel (0) target = $region9
    $region8: #{transformer_encoder_block.1} parent=1 // pred_region
      _
    $region9: #{transformer_encoder_block.1} parent=1 // pred_fallthru
      _
    // Predicated region
    $region10: #{transformer_encoder_block.1} parent=1 // pred_check
      _
    $region11: #{transformer_encoder_block.1} parent=1 // pred_check_branch
      %28 = sbr.rel (0) target = $region13
    $region12: #{transformer_encoder_block.1} parent=1 // pred_region
      _
    $region13: #{transformer_encoder_block.1} parent=1 // pred_fallthru
      _
    // Predicated region
    $region14: #{transformer_encoder_block.1} parent=1 // pred_check
      _
    $region15: #{transformer_encoder_block.1} parent=1 // pred_check_branch
      %30 = sbr.rel (0) target = $region17
    $region16: #{transformer_encoder_block.1} parent=1 // pred_region
      _
    $region17: #{transformer_encoder_block.1} parent=1 // pred_fallthru
      _
    // Predicated region
    $region18: #{transformer_encoder_block.1} parent=1 // pred_check
      _
    $region19: #{transformer_encoder_block.1} parent=1 // pred_check_branch
      %32 = sbr.rel (0) target = $region21
    $region20: #{transformer_encoder_block.1} parent=1 // pred_region
      _
    $region21: #{transformer_encoder_block.1} parent=1 // pred_fallthru
      _
    // Predicated region
    $region22: #{transformer_encoder_block.1} parent=1 // pred_check
      _
    $region23: #{transformer_encoder_block.1} parent=1 // pred_check_branch
      %34 = sbr.rel (0) target = $region25
    $region24: #{transformer_encoder_block.1} parent=1 // pred_region
      _
    $region25: #{transformer_encoder_block.1} parent=1 // pred_fallthru
      _
    // Predicated region
    $region26: #{transformer_encoder_block.1} parent=1 // pred_check
      _
    $region27: #{transformer_encoder_block.1} parent=1 // pred_check_branch
      %36 = sbr.rel (0) target = $region29
    $region28: #{transformer_encoder_block.1} parent=1 // pred_region
      _
    $region29: #{transformer_encoder_block.1} parent=1 // pred_fallthru
      _
    // Predicated region
    $region30: #{transformer_encoder_block.1} parent=1 // pred_check
      _
    $region31: #{transformer_encoder_block.1} parent=1 // pred_check_branch
      %38 = sbr.rel (0) target = $region33
    $region32: #{transformer_encoder_block.1} parent=1 // pred_region
      _
    $region33: #{transformer_encoder_block.1} parent=1 // pred_fallthru
      _
    // Predicated region
    $region34: #{transformer_encoder_block.1} parent=1 // pred_check
      _
    $region35: #{transformer_encoder_block.1} parent=1 // pred_check_branch
      %40 = sbr.rel (0) target = $region37
    $region36: #{transformer_encoder_block.1} parent=1 // pred_region
      _
    $region37: #{transformer_encoder_block.1} parent=1 // pred_fallthru
      _
    // Predicated region
    $region38: #{transformer_encoder_block.1} parent=1 // pred_check
      _
    $region39: #{transformer_encoder_block.1} parent=1 // pred_check_branch
      %42 = sbr.rel (0) target = $region41
    $region40: #{transformer_encoder_block.1} parent=1 // pred_region
      _
    $region41: #{transformer_encoder_block.1} parent=1 // pred_fallthru
      _
    // Predicated region
    $region42: #{transformer_encoder_block.1} parent=1 // pred_check
      _
    $region43: #{transformer_encoder_block.1} parent=1 // pred_check_branch
      %44 = sbr.rel (0) target = $region45
    $region44: #{transformer_encoder_block.1} parent=1 // pred_region
      _
    $region45: #{transformer_encoder_block.1} parent=1 // pred_fallthru
      _
    // Predicated region
    $region46: #{transformer_encoder_block.1} parent=1 // pred_check
      _
    $region47: #{transformer_encoder_block.1} parent=1 // pred_check_branch
      %46 = sbr.rel (0) target = $region49
    $region48: #{transformer_encoder_block.1} parent=1 // pred_region
      _
    $region49: #{transformer_encoder_block.1} parent=1 // pred_fallthru
      _
    // Predicated region
    $region50: #{transformer_encoder_block.1} parent=1 // pred_check
      _
    $region51: #{transformer_encoder_block.1} parent=1 // pred_check_branch
      %48 = sbr.rel (0) target = $region53
    $region52: #{transformer_encoder_block.1} parent=1 // pred_region
      _
    $region53: #{transformer_encoder_block.1} parent=1 // pred_fallthru
      _
    // Predicated region
    $region54: #{transformer_encoder_block.1} parent=1 // pred_check
      _
    $region55: #{transformer_encoder_block.1} parent=1 // pred_check_branch
      %50 = sbr.rel (0) target = $region57
    $region56: #{transformer_encoder_block.1} parent=1 // pred_region
      _
    $region57: #{transformer_encoder_block.1} parent=1 // pred_fallthru
      _
    // Predicated region
    $region58: #{transformer_encoder_block.1} parent=1 // pred_check
      _
    $region59: #{transformer_encoder_block.1} parent=1 // pred_check_branch
      %52 = sbr.rel (0) target = $region61
    $region60: #{transformer_encoder_block.1} parent=1 // pred_region
      _
    $region61: #{transformer_encoder_block.1} parent=1 // pred_fallthru
      _
    // Predicated region
    $region62: #{transformer_encoder_block.1} parent=1 // pred_check
      _
    $region63: #{transformer_encoder_block.1} parent=1 // pred_check_branch
      %54 = sbr.rel (0) target = $region65
    $region64: #{transformer_encoder_block.1} parent=1 // pred_region
      _
    $region65: #{transformer_encoder_block.1} parent=1 // pred_fallthru
      _
    // Predicated region
    $region66: #{transformer_encoder_block.1} parent=1 // pred_check
      _
    $region67: #{transformer_encoder_block.1} parent=1 // pred_check_branch
      %56 = sbr.rel (0) target = $region69
    $region68: #{transformer_encoder_block.1} parent=1 // pred_region
      _
    $region69: #{transformer_encoder_block.1} parent=1 // pred_fallthru
      _
    %v57 = vld [vmem:[%s0] sm:$0xff]
    %v58 = vld [vmem:[%s0 + $0x8] sm:$0xff]
    %v59 = vld [vmem:[%s1] sm:$0xff]
    %v60 = vld [vmem:[%s1 + $0x8] sm:$0xff]
    %v61 = vld [vmem:[%s1 + $0x10] sm:$0xff]
    %v62 = vld [vmem:[%s1 + $0x18] sm:$0xff]
    %v63 = vld [vmem:[%s4] sm:$0x1]
    %v65 = vlaneseq
    %v66 = vshrl.u32 %v65, 7
    %v67 = vsub.s32 0, %v66
    %v68 = vrot.slane %v63, %v67
    %vm70 = vcmask 261120
    %v72 = vsel %vm70, %v57, 0
    %v75 = vsel %vm70, %v58, 0
    %77 = vmatprep.subr.mxu0 0.0
    %78 = vmatpush1.msra.mxu0 %v59
    %79 = vmatprep.subr.mxu0 0.0
    %80 = vmatpush1.msra.mxu0 %v60
    %81 = vmatprep.subr.mxu0 0.0
    %82 = vmatpush1.msra.mxu0 %v61
    %83 = vmatprep.subr.mxu0 0.0
    %84 = vmatpush1.msra.mxu0 %v62
    %85 = vmatprep.subr.mxu0 0.0
    %86 = vmatpush1.msra.mxu0 0.0
    %87 = vmatprep.subr.mxu0 0.0
    %88 = vmatpush1.msra.mxu0 0.0
    %89 = vmatprep.subr.mxu0 0.0
    %90 = vmatpush1.msra.mxu0 0.0
    %91 = vmatprep.subr.mxu0 0.0
    %92 = vmatpush1.msra.mxu0 0.0
    %93 = vmatprep.subr.mxu0 0.0
    %94 = vmatpush1.msra.mxu0 0.0
    %95 = vmatprep.subr.mxu0 0.0
    %96 = vmatpush1.msra.mxu0 0.0
    %97 = vmatprep.subr.mxu0 0.0
    %98 = vmatpush1.msra.mxu0 0.0
    %99 = vmatprep.subr.mxu0 0.0
    %100 = vmatpush1.msra.mxu0 0.0
    %101 = vmatprep.subr.mxu0 0.0
    %102 = vmatpush1.msra.mxu0 0.0
    %103 = vmatprep.subr.mxu0 0.0
    %104 = vmatpush1.msra.mxu0 0.0
    %105 = vmatprep.subr.mxu0 0.0
    %106 = vmatpush1.msra.mxu0 0.0
    %107 = vmatprep.subr.mxu0 0.0
    %108 = vmatpush1.msra.mxu0 0.0
    %109 = vmatprep.subr.mxu0 0.0
    %110 = vmatpush1.msra.mxu0 0.0
    %111 = vmatprep.subr.mxu0 0.0
    %112 = vmatpush1.msra.mxu0 0.0
    %113 = vmatprep.subr.mxu0 0.0
    %114 = vmatpush1.msra.mxu0 0.0
    %115 = vmatprep.subr.mxu0 0.0
    %116 = vmatpush1.msra.mxu0 0.0
    %117 = vmatprep.subr.mxu0 0.0
    %118 = vmatpush1.msra.mxu0 0.0
    %119 = vmatprep.subr.mxu0 0.0
    %120 = vmatpush1.msra.mxu0 0.0
    %121 = vmatprep.subr.mxu0 0.0
    %122 = vmatpush1.msra.mxu0 0.0
    %123 = vmatprep.subr.mxu0 0.0
    %124 = vmatpush1.msra.mxu0 0.0
    %125 = vmatprep.subr.mxu0 0.0
    %126 = vmatpush1.msra.mxu0 0.0
    %127 = vmatprep.subr.mxu0 0.0
    %128 = vmatpush1.msra.mxu0 0.0
    %129 = vmatprep.subr.mxu0 0.0
    %130 = vmatpush1.msra.mxu0 0.0
    %131 = vmatprep.subr.mxu0 0.0
    %132 = vmatpush1.msra.mxu0 0.0
    %133 = vmatprep.subr.mxu0 0.0
    %134 = vmatpush1.msra.mxu0 0.0
    %135 = vmatprep.subr.mxu0 0.0
    %136 = vmatpush1.msra.mxu0 0.0
    %137 = vmatprep.subr.mxu0 0.0
    %138 = vmatpush1.msra.mxu0 0.0
    %139 = vmatprep.subr.mxu0 0.0
    %140 = vmatpush1.msra.mxu0 0.0
    %141 = vmatprep.mubr.f32.mxu0 0.0
    %142 = vmatmul.mubr.f32.gmra.mrb[0].mxu0 %v72
    %v143 = vpop.f32.mrb[0].mxu0
    %v144 = vadd.f32 %v68, %v143
    %v145 = vpop.f32.mrb[0].mxu0
    %146 = vmatprep.mubr.f32.mxu0 0.0
    %147 = vmatmul.mubr.f32.gmra.mrb[0].mxu0 %v75
    %v148 = vpop.f32.mrb[0].mxu0
    %v149 = vadd.f32 %v68, %v148
    %v150 = vpop.f32.mrb[0].mxu0
    %151 = vdwg.mxu0
    %v152 = vld [vmem:[%s2] sm:$0xff]
    %v153 = vld [vmem:[%s2 + $0x8] sm:$0xff]
    %v154 = vld [vmem:[%s2 + $0x10] sm:$0xff]
    %v155 = vld [vmem:[%s2 + $0x18] sm:$0xff]
    %v156 = vld [vmem:[%s5] sm:$0x1]
    %v158 = vlaneseq
    %v159 = vshrl.u32 %v158, 7
    %v160 = vsub.s32 0, %v159
    %v161 = vrot.slane %v156, %v160
    %163 = vmatprep.subr.mxu0 0.0
    %164 = vmatpush1.msra.mxu0 %v152
    %165 = vmatprep.subr.mxu0 0.0
    %166 = vmatpush1.msra.mxu0 %v153
    %167 = vmatprep.subr.mxu0 0.0
    %168 = vmatpush1.msra.mxu0 %v154
    %169 = vmatprep.subr.mxu0 0.0
    %170 = vmatpush1.msra.mxu0 %v155
    %171 = vmatprep.subr.mxu0 0.0
    %172 = vmatpush1.msra.mxu0 0.0
    %173 = vmatprep.subr.mxu0 0.0
    %174 = vmatpush1.msra.mxu0 0.0
    %175 = vmatprep.subr.mxu0 0.0
    %176 = vmatpush1.msra.mxu0 0.0
    %177 = vmatprep.subr.mxu0 0.0
    %178 = vmatpush1.msra.mxu0 0.0
    %179 = vmatprep.subr.mxu0 0.0
    %180 = vmatpush1.msra.mxu0 0.0
    %181 = vmatprep.subr.mxu0 0.0
    %182 = vmatpush1.msra.mxu0 0.0
    %183 = vmatprep.subr.mxu0 0.0
    %184 = vmatpush1.msra.mxu0 0.0
    %185 = vmatprep.subr.mxu0 0.0
    %186 = vmatpush1.msra.mxu0 0.0
    %187 = vmatprep.subr.mxu0 0.0
    %188 = vmatpush1.msra.mxu0 0.0
    %189 = vmatprep.subr.mxu0 0.0
    %190 = vmatpush1.msra.mxu0 0.0
    %191 = vmatprep.subr.mxu0 0.0
    %192 = vmatpush1.msra.mxu0 0.0
    %193 = vmatprep.subr.mxu0 0.0
    %194 = vmatpush1.msra.mxu0 0.0
    %195 = vmatprep.subr.mxu0 0.0
    %196 = vmatpush1.msra.mxu0 0.0
    %197 = vmatprep.subr.mxu0 0.0
    %198 = vmatpush1.msra.mxu0 0.0
    %199 = vmatprep.subr.mxu0 0.0
    %200 = vmatpush1.msra.mxu0 0.0
    %201 = vmatprep.subr.mxu0 0.0
    %202 = vmatpush1.msra.mxu0 0.0
    %203 = vmatprep.subr.mxu0 0.0
    %204 = vmatpush1.msra.mxu0 0.0
    %205 = vmatprep.subr.mxu0 0.0
    %206 = vmatpush1.msra.mxu0 0.0
    %207 = vmatprep.subr.mxu0 0.0
    %208 = vmatpush1.msra.mxu0 0.0
    %209 = vmatprep.subr.mxu0 0.0
    %210 = vmatpush1.msra.mxu0 0.0
    %211 = vmatprep.subr.mxu0 0.0
    %212 = vmatpush1.msra.mxu0 0.0
    %213 = vmatprep.subr.mxu0 0.0
    %214 = vmatpush1.msra.mxu0 0.0
    %215 = vmatprep.subr.mxu0 0.0
    %216 = vmatpush1.msra.mxu0 0.0
    %217 = vmatprep.subr.mxu0 0.0
    %218 = vmatpush1.msra.mxu0 0.0
    %219 = vmatprep.subr.mxu0 0.0
    %220 = vmatpush1.msra.mxu0 0.0
    %221 = vmatprep.subr.mxu0 0.0
    %222 = vmatpush1.msra.mxu0 0.0
    %223 = vmatprep.subr.mxu0 0.0
    %224 = vmatpush1.msra.mxu0 0.0
    %225 = vmatprep.subr.mxu0 0.0
    %226 = vmatpush1.msra.mxu0 0.0
    %227 = vmatprep.mubr.f32.mxu0 0.0
    %228 = vmatmul.mubr.f32.gmra.mrb[0].mxu0 %v72
    %v229 = vpop.f32.mrb[0].mxu0
    %v230 = vadd.f32 %v161, %v229
    %v231 = vpop.f32.mrb[0].mxu0
    %232 = vmatprep.mubr.f32.mxu0 0.0
    %233 = vmatmul.mubr.f32.gmra.mrb[0].mxu0 %v75
    %v234 = vpop.f32.mrb[0].mxu0
    %v235 = vadd.f32 %v161, %v234
    %v236 = vpop.f32.mrb[0].mxu0
    %237 = vdwg.mxu0
    %v238 = vld [vmem:[%s3] sm:$0xff]
    %v239 = vld [vmem:[%s3 + $0x8] sm:$0xff]
    %v240 = vld [vmem:[%s3 + $0x10] sm:$0xff]
    %v241 = vld [vmem:[%s3 + $0x18] sm:$0xff]
    %v242 = vld [vmem:[%s6] sm:$0x1]
    %v244 = vlaneseq
    %v245 = vshrl.u32 %v244, 7
    %v246 = vsub.s32 0, %v245
    %v247 = vrot.slane %v242, %v246
    %249 = vmatprep.subr.mxu0 0.0
    %250 = vmatpush1.msra.mxu0 %v238
    %251 = vmatprep.subr.mxu0 0.0
    %252 = vmatpush1.msra.mxu0 %v239
    %253 = vmatprep.subr.mxu0 0.0
    %254 = vmatpush1.msra.mxu0 %v240
    %255 = vmatprep.subr.mxu0 0.0
    %256 = vmatpush1.msra.mxu0 %v241
    %257 = vmatprep.subr.mxu0 0.0
    %258 = vmatpush1.msra.mxu0 0.0
    %259 = vmatprep.subr.mxu0 0.0
    %260 = vmatpush1.msra.mxu0 0.0
    %261 = vmatprep.subr.mxu0 0.0
    %262 = vmatpush1.msra.mxu0 0.0
    %263 = vmatprep.subr.mxu0 0.0
    %264 = vmatpush1.msra.mxu0 0.0
    %265 = vmatprep.subr.mxu0 0.0
    %266 = vmatpush1.msra.mxu0 0.0
    %267 = vmatprep.subr.mxu0 0.0
    %268 = vmatpush1.msra.mxu0 0.0
    %269 = vmatprep.subr.mxu0 0.0
    %270 = vmatpush1.msra.mxu0 0.0
    %271 = vmatprep.subr.mxu0 0.0
    %272 = vmatpush1.msra.mxu0 0.0
    %273 = vmatprep.subr.mxu0 0.0
    %274 = vmatpush1.msra.mxu0 0.0
    %275 = vmatprep.subr.mxu0 0.0
    %276 = vmatpush1.msra.mxu0 0.0
    %277 = vmatprep.subr.mxu0 0.0
    %278 = vmatpush1.msra.mxu0 0.0
    %279 = vmatprep.subr.mxu0 0.0
    %280 = vmatpush1.msra.mxu0 0.0
    %281 = vmatprep.subr.mxu0 0.0
    %282 = vmatpush1.msra.mxu0 0.0
    %283 = vmatprep.subr.mxu0 0.0
    %284 = vmatpush1.msra.mxu0 0.0
    %285 = vmatprep.subr.mxu0 0.0
    %286 = vmatpush1.msra.mxu0 0.0
    %287 = vmatprep.subr.mxu0 0.0
    %288 = vmatpush1.msra.mxu0 0.0
    %289 = vmatprep.subr.mxu0 0.0
    %290 = vmatpush1.msra.mxu0 0.0
    %291 = vmatprep.subr.mxu0 0.0
    %292 = vmatpush1.msra.mxu0 0.0
    %293 = vmatprep.subr.mxu0 0.0
    %294 = vmatpush1.msra.mxu0 0.0
    %295 = vmatprep.subr.mxu0 0.0
    %296 = vmatpush1.msra.mxu0 0.0
    %297 = vmatprep.subr.mxu0 0.0
    %298 = vmatpush1.msra.mxu0 0.0
    %299 = vmatprep.subr.mxu0 0.0
    %300 = vmatpush1.msra.mxu0 0.0
    %301 = vmatprep.subr.mxu0 0.0
    %302 = vmatpush1.msra.mxu0 0.0
    %303 = vmatprep.subr.mxu0 0.0
    %304 = vmatpush1.msra.mxu0 0.0
    %305 = vmatprep.subr.mxu0 0.0
    %306 = vmatpush1.msra.mxu0 0.0
    %307 = vmatprep.subr.mxu0 0.0
    %308 = vmatpush1.msra.mxu0 0.0
    %309 = vmatprep.subr.mxu0 0.0
    %310 = vmatpush1.msra.mxu0 0.0
    %311 = vmatprep.subr.mxu0 0.0
    %312 = vmatpush1.msra.mxu0 0.0
    %313 = vmatprep.mubr.f32.mxu0 0.0
    %314 = vmatmul.mubr.f32.gmra.mrb[0].mxu0 %v72
    %v315 = vpop.f32.mrb[0].mxu0
    %v316 = vadd.f32 %v247, %v315
    %v317 = vpop.f32.mrb[0].mxu0
    %318 = vmatprep.mubr.f32.mxu0 0.0
    %319 = vmatmul.mubr.f32.gmra.mrb[0].mxu0 %v75
    %v320 = vpop.f32.mrb[0].mxu0
    %v321 = vadd.f32 %v247, %v320
    %v322 = vpop.f32.mrb[0].mxu0
    %323 = vdwg.mxu0
    %vm324 = vcmask 64512
    %v326 = vsel %vm324, %v144, 0
    %v329 = vsel %vm324, %v230, 0
    %331 = vmatprep.subr.mxu0 0.0
    %332 = vmatpush1.xpose.msra.mxu0 %v329
    %333 = vmatprep.subr.mxu0 0.0
    %334 = vmatpush1.xpose.msra.mxu0 0.0
    %335 = vmatprep.subr.mxu0 0.0
    %336 = vmatpush1.xpose.msra.mxu0 0.0
    %337 = vmatprep.subr.mxu0 0.0
    %338 = vmatpush1.xpose.msra.mxu0 0.0
    %339 = vmatprep.subr.mxu0 0.0
    %340 = vmatpush1.xpose.msra.mxu0 0.0
    %341 = vmatprep.subr.mxu0 0.0
    %342 = vmatpush1.xpose.msra.mxu0 0.0
    %343 = vmatprep.subr.mxu0 0.0
    %344 = vmatpush1.xpose.msra.mxu0 0.0
    %345 = vmatprep.subr.mxu0 0.0
    %346 = vmatpush1.xpose.msra.mxu0 0.0
    %347 = vmatprep.subr.mxu0 0.0
    %348 = vmatpush1.xpose.msra.mxu0 0.0
    %349 = vmatprep.subr.mxu0 0.0
    %350 = vmatpush1.xpose.msra.mxu0 0.0
    %351 = vmatprep.subr.mxu0 0.0
    %352 = vmatpush1.xpose.msra.mxu0 0.0
    %353 = vmatprep.subr.mxu0 0.0
    %354 = vmatpush1.xpose.msra.mxu0 0.0
    %355 = vmatprep.subr.mxu0 0.0
    %356 = vmatpush1.xpose.msra.mxu0 0.0
    %357 = vmatprep.subr.mxu0 0.0
    %358 = vmatpush1.xpose.msra.mxu0 0.0
    %359 = vmatprep.subr.mxu0 0.0
    %360 = vmatpush1.xpose.msra.mxu0 0.0
    %361 = vmatprep.subr.mxu0 0.0
    %362 = vmatpush1.xpose.msra.mxu0 0.0
    %363 = vmatprep.subr.mxu0 0.0
    %364 = vmatpush1.xpose.msra.mxu0 0.0
    %365 = vmatprep.subr.mxu0 0.0
    %366 = vmatpush1.xpose.msra.mxu0 0.0
    %367 = vmatprep.subr.mxu0 0.0
    %368 = vmatpush1.xpose.msra.mxu0 0.0
    %369 = vmatprep.subr.mxu0 0.0
    %370 = vmatpush1.xpose.msra.mxu0 0.0
    %371 = vmatprep.subr.mxu0 0.0
    %372 = vmatpush1.xpose.msra.mxu0 0.0
    %373 = vmatprep.subr.mxu0 0.0
    %374 = vmatpush1.xpose.msra.mxu0 0.0
    %375 = vmatprep.subr.mxu0 0.0
    %376 = vmatpush1.xpose.msra.mxu0 0.0
    %377 = vmatprep.subr.mxu0 0.0
    %378 = vmatpush1.xpose.msra.mxu0 0.0
    %379 = vmatprep.subr.mxu0 0.0
    %380 = vmatpush1.xpose.msra.mxu0 0.0
    %381 = vmatprep.subr.mxu0 0.0
    %382 = vmatpush1.xpose.msra.mxu0 0.0
    %383 = vmatprep.subr.mxu0 0.0
    %384 = vmatpush1.xpose.msra.mxu0 0.0
    %385 = vmatprep.subr.mxu0 0.0
    %386 = vmatpush1.xpose.msra.mxu0 0.0
    %387 = vmatprep.subr.mxu0 0.0
    %388 = vmatpush1.xpose.msra.mxu0 0.0
    %389 = vmatprep.subr.mxu0 0.0
    %390 = vmatpush1.xpose.msra.mxu0 0.0
    %391 = vmatprep.subr.mxu0 0.0
    %392 = vmatpush1.xpose.msra.mxu0 0.0
    %393 = vmatprep.subr.mxu0 0.0
    %394 = vmatpush1.xpose.msra.mxu0 0.0
    %395 = vmatprep.mubr.f32.mxu0 0.0
    %396 = vmatmul.mubr.f32.gmra.mrb[0].mxu0 %v326
    %v397 = vpop.f32.mrb[0].mxu0
    %v398 = vadd.f32 0.0, %v397
    %v399 = vpop.f32.mrb[0].mxu0
    %400 = vdwg.mxu0
    %v401 = vmul.f32 %v398, 0.35355338
    %v402 = vsel %vm324, %v401, -inf
    %403 = vmax.xlane.f32.xlu0 %v402
    %v404 = vpop.xlane.xlu0 %403
    %v405 = vsub.f32 %v401, %v404
    %v406 = vmul.f32 %v405, 1.442695
    %v407 = vpow.pop %v406
    %v408 = vsel %vm324, %v407, 0.0
    %409 = vadd.xlane.f32.xlu0 %v408
    %v410 = vpop.xlane.xlu0 %409
    %v411 = vrcp.pop %v410
    %v412 = vmul.f32 %v407, %v411
    %v414 = vsel %vm324, %v412, 0
    %416 = vmatprep.subr.mxu0 0.0
    %417 = vmatpush1.msra.mxu0 %v316
    %418 = vmatprep.subr.mxu0 0.0
    %419 = vmatpush1.msra.mxu0 0.0
    %420 = vmatprep.subr.mxu0 0.0
    %421 = vmatpush1.msra.mxu0 0.0
    %422 = vmatprep.subr.mxu0 0.0
    %423 = vmatpush1.msra.mxu0 0.0
    %424 = vmatprep.subr.mxu0 0.0
    %425 = vmatpush1.msra.mxu0 0.0
    %426 = vmatprep.subr.mxu0 0.0
    %427 = vmatpush1.msra.mxu0 0.0
    %428 = vmatprep.subr.mxu0 0.0
    %429 = vmatpush1.msra.mxu0 0.0
    %430 = vmatprep.subr.mxu0 0.0
    %431 = vmatpush1.msra.mxu0 0.0
    %432 = vmatprep.subr.mxu0 0.0
    %433 = vmatpush1.msra.mxu0 0.0
    %434 = vmatprep.subr.mxu0 0.0
    %435 = vmatpush1.msra.mxu0 0.0
    %436 = vmatprep.subr.mxu0 0.0
    %437 = vmatpush1.msra.mxu0 0.0
    %438 = vmatprep.subr.mxu0 0.0
    %439 = vmatpush1.msra.mxu0 0.0
    %440 = vmatprep.subr.mxu0 0.0
    %441 = vmatpush1.msra.mxu0 0.0
    %442 = vmatprep.subr.mxu0 0.0
    %443 = vmatpush1.msra.mxu0 0.0
    %444 = vmatprep.subr.mxu0 0.0
    %445 = vmatpush1.msra.mxu0 0.0
    %446 = vmatprep.subr.mxu0 0.0
    %447 = vmatpush1.msra.mxu0 0.0
    %448 = vmatprep.subr.mxu0 0.0
    %449 = vmatpush1.msra.mxu0 0.0
    %450 = vmatprep.subr.mxu0 0.0
    %451 = vmatpush1.msra.mxu0 0.0
    %452 = vmatprep.subr.mxu0 0.0
    %453 = vmatpush1.msra.mxu0 0.0
    %454 = vmatprep.subr.mxu0 0.0
    %455 = vmatpush1.msra.mxu0 0.0
    %456 = vmatprep.subr.mxu0 0.0
    %457 = vmatpush1.msra.mxu0 0.0
    %458 = vmatprep.subr.mxu0 0.0
    %459 = vmatpush1.msra.mxu0 0.0
    %460 = vmatprep.subr.mxu0 0.0
    %461 = vmatpush1.msra.mxu0 0.0
    %462 = vmatprep.subr.mxu0 0.0
    %463 = vmatpush1.msra.mxu0 0.0
    %464 = vmatprep.subr.mxu0 0.0
    %465 = vmatpush1.msra.mxu0 0.0
    %466 = vmatprep.subr.mxu0 0.0
    %467 = vmatpush1.msra.mxu0 0.0
    %468 = vmatprep.subr.mxu0 0.0
    %469 = vmatpush1.msra.mxu0 0.0
    %470 = vmatprep.subr.mxu0 0.0
    %471 = vmatpush1.msra.mxu0 0.0
    %472 = vmatprep.subr.mxu0 0.0
    %473 = vmatpush1.msra.mxu0 0.0
    %474 = vmatprep.subr.mxu0 0.0
    %475 = vmatpush1.msra.mxu0 0.0
    %476 = vmatprep.subr.mxu0 0.0
    %477 = vmatpush1.msra.mxu0 0.0
    %478 = vmatprep.subr.mxu0 0.0
    %479 = vmatpush1.msra.mxu0 0.0
    %480 = vmatprep.mubr.f32.mxu0 0.0
    %481 = vmatmul.mubr.f32.gmra.mrb[0].mxu0 %v414
    %v482 = vpop.f32.mrb[0].mxu0
    %v483 = vadd.f32 0.0, %v482
    %v484 = vpop.f32.mrb[0].mxu0
    %485 = vdwg.mxu0
    %486 = vst.msk [vmem:[#allocation2] sm:$0xff] %vm324, %v483
    %487 = vrot.lane.b32.xlu0 %v144, 120
    %v488 = vpop.permute.xlu0 %487
    %489 = vrot.lane.b32.xlu0 %v230, 120
    %v490 = vpop.permute.xlu0 %489
    %v491 = vsel %vm324, %v488, 0
    %v493 = vsel %vm324, %v490, 0
    %495 = vmatprep.subr.mxu0 0.0
    %496 = vmatpush1.xpose.msra.mxu0 %v493
    %497 = vmatprep.subr.mxu0 0.0
    %498 = vmatpush1.xpose.msra.mxu0 0.0
    %499 = vmatprep.subr.mxu0 0.0
    %500 = vmatpush1.xpose.msra.mxu0 0.0
    %501 = vmatprep.subr.mxu0 0.0
    %502 = vmatpush1.xpose.msra.mxu0 0.0
    %503 = vmatprep.subr.mxu0 0.0
    %504 = vmatpush1.xpose.msra.mxu0 0.0
    %505 = vmatprep.subr.mxu0 0.0
    %506 = vmatpush1.xpose.msra.mxu0 0.0
    %507 = vmatprep.subr.mxu0 0.0
    %508 = vmatpush1.xpose.msra.mxu0 0.0
    %509 = vmatprep.subr.mxu0 0.0
    %510 = vmatpush1.xpose.msra.mxu0 0.0
    %511 = vmatprep.subr.mxu0 0.0
    %512 = vmatpush1.xpose.msra.mxu0 0.0
    %513 = vmatprep.subr.mxu0 0.0
    %514 = vmatpush1.xpose.msra.mxu0 0.0
    %515 = vmatprep.subr.mxu0 0.0
    %516 = vmatpush1.xpose.msra.mxu0 0.0
    %517 = vmatprep.subr.mxu0 0.0
    %518 = vmatpush1.xpose.msra.mxu0 0.0
    %519 = vmatprep.subr.mxu0 0.0
    %520 = vmatpush1.xpose.msra.mxu0 0.0
    %521 = vmatprep.subr.mxu0 0.0
    %522 = vmatpush1.xpose.msra.mxu0 0.0
    %523 = vmatprep.subr.mxu0 0.0
    %524 = vmatpush1.xpose.msra.mxu0 0.0
    %525 = vmatprep.subr.mxu0 0.0
    %526 = vmatpush1.xpose.msra.mxu0 0.0
    %527 = vmatprep.subr.mxu0 0.0
    %528 = vmatpush1.xpose.msra.mxu0 0.0
    %529 = vmatprep.subr.mxu0 0.0
    %530 = vmatpush1.xpose.msra.mxu0 0.0
    %531 = vmatprep.subr.mxu0 0.0
    %532 = vmatpush1.xpose.msra.mxu0 0.0
    %533 = vmatprep.subr.mxu0 0.0
    %534 = vmatpush1.xpose.msra.mxu0 0.0
    %535 = vmatprep.subr.mxu0 0.0
    %536 = vmatpush1.xpose.msra.mxu0 0.0
    %537 = vmatprep.subr.mxu0 0.0
    %538 = vmatpush1.xpose.msra.mxu0 0.0
    %539 = vmatprep.subr.mxu0 0.0
    %540 = vmatpush1.xpose.msra.mxu0 0.0
    %541 = vmatprep.subr.mxu0 0.0
    %542 = vmatpush1.xpose.msra.mxu0 0.0
    %543 = vmatprep.subr.mxu0 0.0
    %544 = vmatpush1.xpose.msra.mxu0 0.0
    %545 = vmatprep.subr.mxu0 0.0
    %546 = vmatpush1.xpose.msra.mxu0 0.0
    %547 = vmatprep.subr.mxu0 0.0
    %548 = vmatpush1.xpose.msra.mxu0 0.0
    %549 = vmatprep.subr.mxu0 0.0
    %550 = vmatpush1.xpose.msra.mxu0 0.0
    %551 = vmatprep.subr.mxu0 0.0
    %552 = vmatpush1.xpose.msra.mxu0 0.0
    %553 = vmatprep.subr.mxu0 0.0
    %554 = vmatpush1.xpose.msra.mxu0 0.0
    %555 = vmatprep.subr.mxu0 0.0
    %556 = vmatpush1.xpose.msra.mxu0 0.0
    %557 = vmatprep.subr.mxu0 0.0
    %558 = vmatpush1.xpose.msra.mxu0 0.0
    %559 = vmatprep.mubr.f32.mxu0 0.0
    %560 = vmatmul.mubr.f32.gmra.mrb[0].mxu0 %v491
    %v561 = vpop.f32.mrb[0].mxu0
    %v562 = vadd.f32 0.0, %v561
    %v563 = vpop.f32.mrb[0].mxu0
    %564 = vdwg.mxu0
    %v565 = vmul.f32 %v562, 0.35355338
    %v566 = vsel %vm324, %v565, -inf
    %567 = vmax.xlane.f32.xlu0 %v566
    %v568 = vpop.xlane.xlu0 %567
    %v569 = vsub.f32 %v565, %v568
    %v570 = vmul.f32 %v569, 1.442695
    %v571 = vpow.pop %v570
    %v572 = vsel %vm324, %v571, 0.0
    %573 = vadd.xlane.f32.xlu0 %v572
    %v574 = vpop.xlane.xlu0 %573
    %v575 = vrcp.pop %v574
    %v576 = vmul.f32 %v571, %v575
    %578 = vrot.lane.b32.xlu0 %v316, 120
    %v579 = vpop.permute.xlu0 %578
    %v582 = vsel %vm324, %v576, 0
    %584 = vmatprep.subr.mxu0 0.0
    %585 = vmatpush1.msra.mxu0 %v579
    %586 = vmatprep.subr.mxu0 0.0
    %587 = vmatpush1.msra.mxu0 0.0
    %588 = vmatprep.subr.mxu0 0.0
    %589 = vmatpush1.msra.mxu0 0.0
    %590 = vmatprep.subr.mxu0 0.0
    %591 = vmatpush1.msra.mxu0 0.0
    %592 = vmatprep.subr.mxu0 0.0
    %593 = vmatpush1.msra.mxu0 0.0
    %594 = vmatprep.subr.mxu0 0.0
    %595 = vmatpush1.msra.mxu0 0.0
    %596 = vmatprep.subr.mxu0 0.0
    %597 = vmatpush1.msra.mxu0 0.0
    %598 = vmatprep.subr.mxu0 0.0
    %599 = vmatpush1.msra.mxu0 0.0
    %600 = vmatprep.subr.mxu0 0.0
    %601 = vmatpush1.msra.mxu0 0.0
    %602 = vmatprep.subr.mxu0 0.0
    %603 = vmatpush1.msra.mxu0 0.0
    %604 = vmatprep.subr.mxu0 0.0
    %605 = vmatpush1.msra.mxu0 0.0
    %606 = vmatprep.subr.mxu0 0.0
    %607 = vmatpush1.msra.mxu0 0.0
    %608 = vmatprep.subr.mxu0 0.0
    %609 = vmatpush1.msra.mxu0 0.0
    %610 = vmatprep.subr.mxu0 0.0
    %611 = vmatpush1.msra.mxu0 0.0
    %612 = vmatprep.subr.mxu0 0.0
    %613 = vmatpush1.msra.mxu0 0.0
    %614 = vmatprep.subr.mxu0 0.0
    %615 = vmatpush1.msra.mxu0 0.0
    %616 = vmatprep.subr.mxu0 0.0
    %617 = vmatpush1.msra.mxu0 0.0
    %618 = vmatprep.subr.mxu0 0.0
    %619 = vmatpush1.msra.mxu0 0.0
    %620 = vmatprep.subr.mxu0 0.0
    %621 = vmatpush1.msra.mxu0 0.0
    %622 = vmatprep.subr.mxu0 0.0
    %623 = vmatpush1.msra.mxu0 0.0
    %624 = vmatprep.subr.mxu0 0.0
    %625 = vmatpush1.msra.mxu0 0.0
    %626 = vmatprep.subr.mxu0 0.0
    %627 = vmatpush1.msra.mxu0 0.0
    %628 = vmatprep.subr.mxu0 0.0
    %629 = vmatpush1.msra.mxu0 0.0
    %630 = vmatprep.subr.mxu0 0.0
    %631 = vmatpush1.msra.mxu0 0.0
    %632 = vmatprep.subr.mxu0 0.0
    %633 = vmatpush1.msra.mxu0 0.0
    %634 = vmatprep.subr.mxu0 0.0
    %635 = vmatpush1.msra.mxu0 0.0
    %636 = vmatprep.subr.mxu0 0.0
    %637 = vmatpush1.msra.mxu0 0.0
    %638 = vmatprep.subr.mxu0 0.0
    %639 = vmatpush1.msra.mxu0 0.0
    %640 = vmatprep.subr.mxu0 0.0
    %641 = vmatpush1.msra.mxu0 0.0
    %642 = vmatprep.subr.mxu0 0.0
    %643 = vmatpush1.msra.mxu0 0.0
    %644 = vmatprep.subr.mxu0 0.0
    %645 = vmatpush1.msra.mxu0 0.0
    %646 = vmatprep.subr.mxu0 0.0
    %647 = vmatpush1.msra.mxu0 0.0
    %648 = vmatprep.mubr.f32.mxu0 0.0
    %649 = vmatmul.mubr.f32.gmra.mrb[0].mxu0 %v582
    %v650 = vpop.f32.mrb[0].mxu0
    %v651 = vadd.f32 0.0, %v650
    %v652 = vpop.f32.mrb[0].mxu0
    %653 = vdwg.mxu0
    %655 = vrot.lane.b32.xlu0 %v651, 8
    %v656 = vpop.permute.xlu0 %655
    %vm658 = vcmask 130112
    %659 = vst.msk [vmem:[#allocation2] sm:$0xff] %vm658, %v656
    %660 = vrot.lane.b32.xlu0 %v144, 112
    %v661 = vpop.permute.xlu0 %660
    %662 = vrot.lane.b32.xlu0 %v230, 112
    %v663 = vpop.permute.xlu0 %662
    %v664 = vsel %vm324, %v661, 0
    %v666 = vsel %vm324, %v663, 0
    %668 = vmatprep.subr.mxu0 0.0
    %669 = vmatpush1.xpose.msra.mxu0 %v666
    %670 = vmatprep.subr.mxu0 0.0
    %671 = vmatpush1.xpose.msra.mxu0 0.0
    %672 = vmatprep.subr.mxu0 0.0
    %673 = vmatpush1.xpose.msra.mxu0 0.0
    %674 = vmatprep.subr.mxu0 0.0
    %675 = vmatpush1.xpose.msra.mxu0 0.0
    %676 = vmatprep.subr.mxu0 0.0
    %677 = vmatpush1.xpose.msra.mxu0 0.0
    %678 = vmatprep.subr.mxu0 0.0
    %679 = vmatpush1.xpose.msra.mxu0 0.0
    %680 = vmatprep.subr.mxu0 0.0
    %681 = vmatpush1.xpose.msra.mxu0 0.0
    %682 = vmatprep.subr.mxu0 0.0
    %683 = vmatpush1.xpose.msra.mxu0 0.0
    %684 = vmatprep.subr.mxu0 0.0
    %685 = vmatpush1.xpose.msra.mxu0 0.0
    %686 = vmatprep.subr.mxu0 0.0
    %687 = vmatpush1.xpose.msra.mxu0 0.0
    %688 = vmatprep.subr.mxu0 0.0
    %689 = vmatpush1.xpose.msra.mxu0 0.0
    %690 = vmatprep.subr.mxu0 0.0
    %691 = vmatpush1.xpose.msra.mxu0 0.0
    %692 = vmatprep.subr.mxu0 0.0
    %693 = vmatpush1.xpose.msra.mxu0 0.0
    %694 = vmatprep.subr.mxu0 0.0
    %695 = vmatpush1.xpose.msra.mxu0 0.0
    %696 = vmatprep.subr.mxu0 0.0
    %697 = vmatpush1.xpose.msra.mxu0 0.0
    %698 = vmatprep.subr.mxu0 0.0
    %699 = vmatpush1.xpose.msra.mxu0 0.0
    %700 = vmatprep.subr.mxu0 0.0
    %701 = vmatpush1.xpose.msra.mxu0 0.0
    %702 = vmatprep.subr.mxu0 0.0
    %703 = vmatpush1.xpose.msra.mxu0 0.0
    %704 = vmatprep.subr.mxu0 0.0
    %705 = vmatpush1.xpose.msra.mxu0 0.0
    %706 = vmatprep.subr.mxu0 0.0
    %707 = vmatpush1.xpose.msra.mxu0 0.0
    %708 = vmatprep.subr.mxu0 0.0
    %709 = vmatpush1.xpose.msra.mxu0 0.0
    %710 = vmatprep.subr.mxu0 0.0
    %711 = vmatpush1.xpose.msra.mxu0 0.0
    %712 = vmatprep.subr.mxu0 0.0
    %713 = vmatpush1.xpose.msra.mxu0 0.0
    %714 = vmatprep.subr.mxu0 0.0
    %715 = vmatpush1.xpose.msra.mxu0 0.0
    %716 = vmatprep.subr.mxu0 0.0
    %717 = vmatpush1.xpose.msra.mxu0 0.0
    %718 = vmatprep.subr.mxu0 0.0
    %719 = vmatpush1.xpose.msra.mxu0 0.0
    %720 = vmatprep.subr.mxu0 0.0
    %721 = vmatpush1.xpose.msra.mxu0 0.0
    %722 = vmatprep.subr.mxu0 0.0
    %723 = vmatpush1.xpose.msra.mxu0 0.0
    %724 = vmatprep.subr.mxu0 0.0
    %725 = vmatpush1.xpose.msra.mxu0 0.0
    %726 = vmatprep.subr.mxu0 0.0
    %727 = vmatpush1.xpose.msra.mxu0 0.0
    %728 = vmatprep.subr.mxu0 0.0
    %729 = vmatpush1.xpose.msra.mxu0 0.0
    %730 = vmatprep.subr.mxu0 0.0
    %731 = vmatpush1.xpose.msra.mxu0 0.0
    %732 = vmatprep.mubr.f32.mxu0 0.0
    %733 = vmatmul.mubr.f32.gmra.mrb[0].mxu0 %v664
    %v734 = vpop.f32.mrb[0].mxu0
    %v735 = vadd.f32 0.0, %v734
    %v736 = vpop.f32.mrb[0].mxu0
    %737 = vdwg.mxu0
    %v738 = vmul.f32 %v735, 0.35355338
    %v739 = vsel %vm324, %v738, -inf
    %740 = vmax.xlane.f32.xlu0 %v739
    %v741 = vpop.xlane.xlu0 %740
    %v742 = vsub.f32 %v738, %v741
    %v743 = vmul.f32 %v742, 1.442695
    %v744 = vpow.pop %v743
    %v745 = vsel %vm324, %v744, 0.0
    %746 = vadd.xlane.f32.xlu0 %v745
    %v747 = vpop.xlane.xlu0 %746
    %v748 = vrcp.pop %v747
    %v749 = vmul.f32 %v744, %v748
    %750 = vrot.lane.b32.xlu0 %v316, 112
    %v751 = vpop.permute.xlu0 %750
    %v754 = vsel %vm324, %v749, 0
    %756 = vmatprep.subr.mxu0 0.0
    %757 = vmatpush1.msra.mxu0 %v751
    %758 = vmatprep.subr.mxu0 0.0
    %759 = vmatpush1.msra.mxu0 0.0
    %760 = vmatprep.subr.mxu0 0.0
    %761 = vmatpush1.msra.mxu0 0.0
    %762 = vmatprep.subr.mxu0 0.0
    %763 = vmatpush1.msra.mxu0 0.0
    %764 = vmatprep.subr.mxu0 0.0
    %765 = vmatpush1.msra.mxu0 0.0
    %766 = vmatprep.subr.mxu0 0.0
    %767 = vmatpush1.msra.mxu0 0.0
    %768 = vmatprep.subr.mxu0 0.0
    %769 = vmatpush1.msra.mxu0 0.0
    %770 = vmatprep.subr.mxu0 0.0
    %771 = vmatpush1.msra.mxu0 0.0
    %772 = vmatprep.subr.mxu0 0.0
    %773 = vmatpush1.msra.mxu0 0.0
    %774 = vmatprep.subr.mxu0 0.0
    %775 = vmatpush1.msra.mxu0 0.0
    %776 = vmatprep.subr.mxu0 0.0
    %777 = vmatpush1.msra.mxu0 0.0
    %778 = vmatprep.subr.mxu0 0.0
    %779 = vmatpush1.msra.mxu0 0.0
    %780 = vmatprep.subr.mxu0 0.0
    %781 = vmatpush1.msra.mxu0 0.0
    %782 = vmatprep.subr.mxu0 0.0
    %783 = vmatpush1.msra.mxu0 0.0
    %784 = vmatprep.subr.mxu0 0.0
    %785 = vmatpush1.msra.mxu0 0.0
    %786 = vmatprep.subr.mxu0 0.0
    %787 = vmatpush1.msra.mxu0 0.0
    %788 = vmatprep.subr.mxu0 0.0
    %789 = vmatpush1.msra.mxu0 0.0
    %790 = vmatprep.subr.mxu0 0.0
    %791 = vmatpush1.msra.mxu0 0.0
    %792 = vmatprep.subr.mxu0 0.0
    %793 = vmatpush1.msra.mxu0 0.0
    %794 = vmatprep.subr.mxu0 0.0
    %795 = vmatpush1.msra.mxu0 0.0
    %796 = vmatprep.subr.mxu0 0.0
    %797 = vmatpush1.msra.mxu0 0.0
    %798 = vmatprep.subr.mxu0 0.0
    %799 = vmatpush1.msra.mxu0 0.0
    %800 = vmatprep.subr.mxu0 0.0
    %801 = vmatpush1.msra.mxu0 0.0
    %802 = vmatprep.subr.mxu0 0.0
    %803 = vmatpush1.msra.mxu0 0.0
    %804 = vmatprep.subr.mxu0 0.0
    %805 = vmatpush1.msra.mxu0 0.0
    %806 = vmatprep.subr.mxu0 0.0
    %807 = vmatpush1.msra.mxu0 0.0
    %808 = vmatprep.subr.mxu0 0.0
    %809 = vmatpush1.msra.mxu0 0.0
    %810 = vmatprep.subr.mxu0 0.0
    %811 = vmatpush1.msra.mxu0 0.0
    %812 = vmatprep.subr.mxu0 0.0
    %813 = vmatpush1.msra.mxu0 0.0
    %814 = vmatprep.subr.mxu0 0.0
    %815 = vmatpush1.msra.mxu0 0.0
    %816 = vmatprep.subr.mxu0 0.0
    %817 = vmatpush1.msra.mxu0 0.0
    %818 = vmatprep.subr.mxu0 0.0
    %819 = vmatpush1.msra.mxu0 0.0
    %820 = vmatprep.mubr.f32.mxu0 0.0
    %821 = vmatmul.mubr.f32.gmra.mrb[0].mxu0 %v754
    %v822 = vpop.f32.mrb[0].mxu0
    %v823 = vadd.f32 0.0, %v822
    %v824 = vpop.f32.mrb[0].mxu0
    %825 = vdwg.mxu0
    %827 = vrot.lane.b32.xlu0 %v823, 16
    %v828 = vpop.permute.xlu0 %827
    %vm830 = vcmask 195712
    %831 = vst.msk [vmem:[#allocation2] sm:$0xff] %vm830, %v828
    %832 = vrot.lane.b32.xlu0 %v144, 104
    %v833 = vpop.permute.xlu0 %832
    %834 = vrot.lane.b32.xlu0 %v230, 104
    %v835 = vpop.permute.xlu0 %834
    %v836 = vsel %vm324, %v833, 0
    %v838 = vsel %vm324, %v835, 0
    %840 = vmatprep.subr.mxu0 0.0
    %841 = vmatpush1.xpose.msra.mxu0 %v838
    %842 = vmatprep.subr.mxu0 0.0
    %843 = vmatpush1.xpose.msra.mxu0 0.0
    %844 = vmatprep.subr.mxu0 0.0
    %845 = vmatpush1.xpose.msra.mxu0 0.0
    %846 = vmatprep.subr.mxu0 0.0
    %847 = vmatpush1.xpose.msra.mxu0 0.0
    %848 = vmatprep.subr.mxu0 0.0
    %849 = vmatpush1.xpose.msra.mxu0 0.0
    %850 = vmatprep.subr.mxu0 0.0
    %851 = vmatpush1.xpose.msra.mxu0 0.0
    %852 = vmatprep.subr.mxu0 0.0
    %853 = vmatpush1.xpose.msra.mxu0 0.0
    %854 = vmatprep.subr.mxu0 0.0
    %855 = vmatpush1.xpose.msra.mxu0 0.0
    %856 = vmatprep.subr.mxu0 0.0
    %857 = vmatpush1.xpose.msra.mxu0 0.0
    %858 = vmatprep.subr.mxu0 0.0
    %859 = vmatpush1.xpose.msra.mxu0 0.0
    %860 = vmatprep.subr.mxu0 0.0
    %861 = vmatpush1.xpose.msra.mxu0 0.0
    %862 = vmatprep.subr.mxu0 0.0
    %863 = vmatpush1.xpose.msra.mxu0 0.0
    %864 = vmatprep.subr.mxu0 0.0
    %865 = vmatpush1.xpose.msra.mxu0 0.0
    %866 = vmatprep.subr.mxu0 0.0
    %867 = vmatpush1.xpose.msra.mxu0 0.0
    %868 = vmatprep.subr.mxu0 0.0
    %869 = vmatpush1.xpose.msra.mxu0 0.0
    %870 = vmatprep.subr.mxu0 0.0
    %871 = vmatpush1.xpose.msra.mxu0 0.0
    %872 = vmatprep.subr.mxu0 0.0
    %873 = vmatpush1.xpose.msra.mxu0 0.0
    %874 = vmatprep.subr.mxu0 0.0
    %875 = vmatpush1.xpose.msra.mxu0 0.0
    %876 = vmatprep.subr.mxu0 0.0
    %877 = vmatpush1.xpose.msra.mxu0 0.0
    %878 = vmatprep.subr.mxu0 0.0
    %879 = vmatpush1.xpose.msra.mxu0 0.0
    %880 = vmatprep.subr.mxu0 0.0
    %881 = vmatpush1.xpose.msra.mxu0 0.0
    %882 = vmatprep.subr.mxu0 0.0
    %883 = vmatpush1.xpose.msra.mxu0 0.0
    %884 = vmatprep.subr.mxu0 0.0
    %885 = vmatpush1.xpose.msra.mxu0 0.0
    %886 = vmatprep.subr.mxu0 0.0
    %887 = vmatpush1.xpose.msra.mxu0 0.0
    %888 = vmatprep.subr.mxu0 0.0
    %889 = vmatpush1.xpose.msra.mxu0 0.0
    %890 = vmatprep.subr.mxu0 0.0
    %891 = vmatpush1.xpose.msra.mxu0 0.0
    %892 = vmatprep.subr.mxu0 0.0
    %893 = vmatpush1.xpose.msra.mxu0 0.0
    %894 = vmatprep.subr.mxu0 0.0
    %895 = vmatpush1.xpose.msra.mxu0 0.0
    %896 = vmatprep.subr.mxu0 0.0
    %897 = vmatpush1.xpose.msra.mxu0 0.0
    %898 = vmatprep.subr.mxu0 0.0
    %899 = vmatpush1.xpose.msra.mxu0 0.0
    %900 = vmatprep.subr.mxu0 0.0
    %901 = vmatpush1.xpose.msra.mxu0 0.0
    %902 = vmatprep.subr.mxu0 0.0
    %903 = vmatpush1.xpose.msra.mxu0 0.0
    %904 = vmatprep.mubr.f32.mxu0 0.0
    %905 = vmatmul.mubr.f32.gmra.mrb[0].mxu0 %v836
    %v906 = vpop.f32.mrb[0].mxu0
    %v907 = vadd.f32 0.0, %v906
    %v908 = vpop.f32.mrb[0].mxu0
    %909 = vdwg.mxu0
    %v910 = vmul.f32 %v907, 0.35355338
    %v911 = vsel %vm324, %v910, -inf
    %912 = vmax.xlane.f32.xlu0 %v911
    %v913 = vpop.xlane.xlu0 %912
    %v914 = vsub.f32 %v910, %v913
    %v915 = vmul.f32 %v914, 1.442695
    %v916 = vpow.pop %v915
    %v917 = vsel %vm324, %v916, 0.0
    %918 = vadd.xlane.f32.xlu0 %v917
    %v919 = vpop.xlane.xlu0 %918
    %v920 = vrcp.pop %v919
    %v921 = vmul.f32 %v916, %v920
    %922 = vrot.lane.b32.xlu0 %v316, 104
    %v923 = vpop.permute.xlu0 %922
    %v926 = vsel %vm324, %v921, 0
    %928 = vmatprep.subr.mxu0 0.0
    %929 = vmatpush1.msra.mxu0 %v923
    %930 = vmatprep.subr.mxu0 0.0
    %931 = vmatpush1.msra.mxu0 0.0
    %932 = vmatprep.subr.mxu0 0.0
    %933 = vmatpush1.msra.mxu0 0.0
    %934 = vmatprep.subr.mxu0 0.0
    %935 = vmatpush1.msra.mxu0 0.0
    %936 = vmatprep.subr.mxu0 0.0
    %937 = vmatpush1.msra.mxu0 0.0
    %938 = vmatprep.subr.mxu0 0.0
    %939 = vmatpush1.msra.mxu0 0.0
    %940 = vmatprep.subr.mxu0 0.0
    %941 = vmatpush1.msra.mxu0 0.0
    %942 = vmatprep.subr.mxu0 0.0
    %943 = vmatpush1.msra.mxu0 0.0
    %944 = vmatprep.subr.mxu0 0.0
    %945 = vmatpush1.msra.mxu0 0.0
    %946 = vmatprep.subr.mxu0 0.0
    %947 = vmatpush1.msra.mxu0 0.0
    %948 = vmatprep.subr.mxu0 0.0
    %949 = vmatpush1.msra.mxu0 0.0
    %950 = vmatprep.subr.mxu0 0.0
    %951 = vmatpush1.msra.mxu0 0.0
    %952 = vmatprep.subr.mxu0 0.0
    %953 = vmatpush1.msra.mxu0 0.0
    %954 = vmatprep.subr.mxu0 0.0
    %955 = vmatpush1.msra.mxu0 0.0
    %956 = vmatprep.subr.mxu0 0.0
    %957 = vmatpush1.msra.mxu0 0.0
    %958 = vmatprep.subr.mxu0 0.0
    %959 = vmatpush1.msra.mxu0 0.0
    %960 = vmatprep.subr.mxu0 0.0
    %961 = vmatpush1.msra.mxu0 0.0
    %962 = vmatprep.subr.mxu0 0.0
    %963 = vmatpush1.msra.mxu0 0.0
    %964 = vmatprep.subr.mxu0 0.0
    %965 = vmatpush1.msra.mxu0 0.0
    %966 = vmatprep.subr.mxu0 0.0
    %967 = vmatpush1.msra.mxu0 0.0
    %968 = vmatprep.subr.mxu0 0.0
    %969 = vmatpush1.msra.mxu0 0.0
    %970 = vmatprep.subr.mxu0 0.0
    %971 = vmatpush1.msra.mxu0 0.0
    %972 = vmatprep.subr.mxu0 0.0
    %973 = vmatpush1.msra.mxu0 0.0
    %974 = vmatprep.subr.mxu0 0.0
    %975 = vmatpush1.msra.mxu0 0.0
    %976 = vmatprep.subr.mxu0 0.0
    %977 = vmatpush1.msra.mxu0 0.0
    %978 = vmatprep.subr.mxu0 0.0
    %979 = vmatpush1.msra.mxu0 0.0
    %980 = vmatprep.subr.mxu0 0.0
    %981 = vmatpush1.msra.mxu0 0.0
    %982 = vmatprep.subr.mxu0 0.0
    %983 = vmatpush1.msra.mxu0 0.0
    %984 = vmatprep.subr.mxu0 0.0
    %985 = vmatpush1.msra.mxu0 0.0
    %986 = vmatprep.subr.mxu0 0.0
    %987 = vmatpush1.msra.mxu0 0.0
    %988 = vmatprep.subr.mxu0 0.0
    %989 = vmatpush1.msra.mxu0 0.0
    %990 = vmatprep.subr.mxu0 0.0
    %991 = vmatpush1.msra.mxu0 0.0
    %992 = vmatprep.mubr.f32.mxu0 0.0
    %993 = vmatmul.mubr.f32.gmra.mrb[0].mxu0 %v926
    %v994 = vpop.f32.mrb[0].mxu0
    %v995 = vadd.f32 0.0, %v994
    %v996 = vpop.f32.mrb[0].mxu0
    %997 = vdwg.mxu0
    %999 = vrot.lane.b32.xlu0 %v995, 24
    %v1000 = vpop.permute.xlu0 %999
    %vm1002 = vcmask 261312
    %1003 = vst.msk [vmem:[#allocation2] sm:$0xff] %vm1002, %v1000
    %v1005 = vsel %vm324, %v149, 0
    %v1008 = vsel %vm324, %v235, 0
    %1010 = vmatprep.subr.mxu0 0.0
    %1011 = vmatpush1.xpose.msra.mxu0 %v1008
    %1012 = vmatprep.subr.mxu0 0.0
    %1013 = vmatpush1.xpose.msra.mxu0 0.0
    %1014 = vmatprep.subr.mxu0 0.0
    %1015 = vmatpush1.xpose.msra.mxu0 0.0
    %1016 = vmatprep.subr.mxu0 0.0
    %1017 = vmatpush1.xpose.msra.mxu0 0.0
    %1018 = vmatprep.subr.mxu0 0.0
    %1019 = vmatpush1.xpose.msra.mxu0 0.0
    %1020 = vmatprep.subr.mxu0 0.0
    %1021 = vmatpush1.xpose.msra.mxu0 0.0
    %1022 = vmatprep.subr.mxu0 0.0
    %1023 = vmatpush1.xpose.msra.mxu0 0.0
    %1024 = vmatprep.subr.mxu0 0.0
    %1025 = vmatpush1.xpose.msra.mxu0 0.0
    %1026 = vmatprep.subr.mxu0 0.0
    %1027 = vmatpush1.xpose.msra.mxu0 0.0
    %1028 = vmatprep.subr.mxu0 0.0
    %1029 = vmatpush1.xpose.msra.mxu0 0.0
    %1030 = vmatprep.subr.mxu0 0.0
    %1031 = vmatpush1.xpose.msra.mxu0 0.0
    %1032 = vmatprep.subr.mxu0 0.0
    %1033 = vmatpush1.xpose.msra.mxu0 0.0
    %1034 = vmatprep.subr.mxu0 0.0
    %1035 = vmatpush1.xpose.msra.mxu0 0.0
    %1036 = vmatprep.subr.mxu0 0.0
    %1037 = vmatpush1.xpose.msra.mxu0 0.0
    %1038 = vmatprep.subr.mxu0 0.0
    %1039 = vmatpush1.xpose.msra.mxu0 0.0
    %1040 = vmatprep.subr.mxu0 0.0
    %1041 = vmatpush1.xpose.msra.mxu0 0.0
    %1042 = vmatprep.subr.mxu0 0.0
    %1043 = vmatpush1.xpose.msra.mxu0 0.0
    %1044 = vmatprep.subr.mxu0 0.0
    %1045 = vmatpush1.xpose.msra.mxu0 0.0
    %1046 = vmatprep.subr.mxu0 0.0
    %1047 = vmatpush1.xpose.msra.mxu0 0.0
    %1048 = vmatprep.subr.mxu0 0.0
    %1049 = vmatpush1.xpose.msra.mxu0 0.0
    %1050 = vmatprep.subr.mxu0 0.0
    %1051 = vmatpush1.xpose.msra.mxu0 0.0
    %1052 = vmatprep.subr.mxu0 0.0
    %1053 = vmatpush1.xpose.msra.mxu0 0.0
    %1054 = vmatprep.subr.mxu0 0.0
    %1055 = vmatpush1.xpose.msra.mxu0 0.0
    %1056 = vmatprep.subr.mxu0 0.0
    %1057 = vmatpush1.xpose.msra.mxu0 0.0
    %1058 = vmatprep.subr.mxu0 0.0
    %1059 = vmatpush1.xpose.msra.mxu0 0.0
    %1060 = vmatprep.subr.mxu0 0.0
    %1061 = vmatpush1.xpose.msra.mxu0 0.0
    %1062 = vmatprep.subr.mxu0 0.0
    %1063 = vmatpush1.xpose.msra.mxu0 0.0
    %1064 = vmatprep.subr.mxu0 0.0
    %1065 = vmatpush1.xpose.msra.mxu0 0.0
    %1066 = vmatprep.subr.mxu0 0.0
    %1067 = vmatpush1.xpose.msra.mxu0 0.0
    %1068 = vmatprep.subr.mxu0 0.0
    %1069 = vmatpush1.xpose.msra.mxu0 0.0
    %1070 = vmatprep.subr.mxu0 0.0
    %1071 = vmatpush1.xpose.msra.mxu0 0.0
    %1072 = vmatprep.subr.mxu0 0.0
    %1073 = vmatpush1.xpose.msra.mxu0 0.0
    %1074 = vmatprep.mubr.f32.mxu0 0.0
    %1075 = vmatmul.mubr.f32.gmra.mrb[0].mxu0 %v1005
    %v1076 = vpop.f32.mrb[0].mxu0
    %v1077 = vadd.f32 0.0, %v1076
    %v1078 = vpop.f32.mrb[0].mxu0
    %1079 = vdwg.mxu0
    %v1080 = vmul.f32 %v1077, 0.35355338
    %v1081 = vsel %vm324, %v1080, -inf
    %1082 = vmax.xlane.f32.xlu0 %v1081
    %v1083 = vpop.xlane.xlu0 %1082
    %v1084 = vsub.f32 %v1080, %v1083
    %v1085 = vmul.f32 %v1084, 1.442695
    %v1086 = vpow.pop %v1085
    %v1087 = vsel %vm324, %v1086, 0.0
    %1088 = vadd.xlane.f32.xlu0 %v1087
    %v1089 = vpop.xlane.xlu0 %1088
    %v1090 = vrcp.pop %v1089
    %v1091 = vmul.f32 %v1086, %v1090
    %v1093 = vsel %vm324, %v1091, 0
    %1095 = vmatprep.subr.mxu0 0.0
    %1096 = vmatpush1.msra.mxu0 %v321
    %1097 = vmatprep.subr.mxu0 0.0
    %1098 = vmatpush1.msra.mxu0 0.0
    %1099 = vmatprep.subr.mxu0 0.0
    %1100 = vmatpush1.msra.mxu0 0.0
    %1101 = vmatprep.subr.mxu0 0.0
    %1102 = vmatpush1.msra.mxu0 0.0
    %1103 = vmatprep.subr.mxu0 0.0
    %1104 = vmatpush1.msra.mxu0 0.0
    %1105 = vmatprep.subr.mxu0 0.0
    %1106 = vmatpush1.msra.mxu0 0.0
    %1107 = vmatprep.subr.mxu0 0.0
    %1108 = vmatpush1.msra.mxu0 0.0
    %1109 = vmatprep.subr.mxu0 0.0
    %1110 = vmatpush1.msra.mxu0 0.0
    %1111 = vmatprep.subr.mxu0 0.0
    %1112 = vmatpush1.msra.mxu0 0.0
    %1113 = vmatprep.subr.mxu0 0.0
    %1114 = vmatpush1.msra.mxu0 0.0
    %1115 = vmatprep.subr.mxu0 0.0
    %1116 = vmatpush1.msra.mxu0 0.0
    %1117 = vmatprep.subr.mxu0 0.0
    %1118 = vmatpush1.msra.mxu0 0.0
    %1119 = vmatprep.subr.mxu0 0.0
    %1120 = vmatpush1.msra.mxu0 0.0
    %1121 = vmatprep.subr.mxu0 0.0
    %1122 = vmatpush1.msra.mxu0 0.0
    %1123 = vmatprep.subr.mxu0 0.0
    %1124 = vmatpush1.msra.mxu0 0.0
    %1125 = vmatprep.subr.mxu0 0.0
    %1126 = vmatpush1.msra.mxu0 0.0
    %1127 = vmatprep.subr.mxu0 0.0
    %1128 = vmatpush1.msra.mxu0 0.0
    %1129 = vmatprep.subr.mxu0 0.0
    %1130 = vmatpush1.msra.mxu0 0.0
    %1131 = vmatprep.subr.mxu0 0.0
    %1132 = vmatpush1.msra.mxu0 0.0
    %1133 = vmatprep.subr.mxu0 0.0
    %1134 = vmatpush1.msra.mxu0 0.0
    %1135 = vmatprep.subr.mxu0 0.0
    %1136 = vmatpush1.msra.mxu0 0.0
    %1137 = vmatprep.subr.mxu0 0.0
    %1138 = vmatpush1.msra.mxu0 0.0
    %1139 = vmatprep.subr.mxu0 0.0
    %1140 = vmatpush1.msra.mxu0 0.0
    %1141 = vmatprep.subr.mxu0 0.0
    %1142 = vmatpush1.msra.mxu0 0.0
    %1143 = vmatprep.subr.mxu0 0.0
    %1144 = vmatpush1.msra.mxu0 0.0
    %1145 = vmatprep.subr.mxu0 0.0
    %1146 = vmatpush1.msra.mxu0 0.0
    %1147 = vmatprep.subr.mxu0 0.0
    %1148 = vmatpush1.msra.mxu0 0.0
    %1149 = vmatprep.subr.mxu0 0.0
    %1150 = vmatpush1.msra.mxu0 0.0
    %1151 = vmatprep.subr.mxu0 0.0
    %1152 = vmatpush1.msra.mxu0 0.0
    %1153 = vmatprep.subr.mxu0 0.0
    %1154 = vmatpush1.msra.mxu0 0.0
    %1155 = vmatprep.subr.mxu0 0.0
    %1156 = vmatpush1.msra.mxu0 0.0
    %1157 = vmatprep.subr.mxu0 0.0
    %1158 = vmatpush1.msra.mxu0 0.0
    %1159 = vmatprep.mubr.f32.mxu0 0.0
    %1160 = vmatmul.mubr.f32.gmra.mrb[0].mxu0 %v1093
    %v1161 = vpop.f32.mrb[0].mxu0
    %v1162 = vadd.f32 0.0, %v1161
    %v1163 = vpop.f32.mrb[0].mxu0
    %1164 = vdwg.mxu0
    %1165 = vst.msk [vmem:[#allocation2 + $0x8] sm:$0xff] %vm324, %v1162
    %1166 = vrot.lane.b32.xlu0 %v149, 120
    %v1167 = vpop.permute.xlu0 %1166
    %1168 = vrot.lane.b32.xlu0 %v235, 120
    %v1169 = vpop.permute.xlu0 %1168
    %v1170 = vsel %vm324, %v1167, 0
    %v1172 = vsel %vm324, %v1169, 0
    %1174 = vmatprep.subr.mxu0 0.0
    %1175 = vmatpush1.xpose.msra.mxu0 %v1172
    %1176 = vmatprep.subr.mxu0 0.0
    %1177 = vmatpush1.xpose.msra.mxu0 0.0
    %1178 = vmatprep.subr.mxu0 0.0
    %1179 = vmatpush1.xpose.msra.mxu0 0.0
    %1180 = vmatprep.subr.mxu0 0.0
    %1181 = vmatpush1.xpose.msra.mxu0 0.0
    %1182 = vmatprep.subr.mxu0 0.0
    %1183 = vmatpush1.xpose.msra.mxu0 0.0
    %1184 = vmatprep.subr.mxu0 0.0
    %1185 = vmatpush1.xpose.msra.mxu0 0.0
    %1186 = vmatprep.subr.mxu0 0.0
    %1187 = vmatpush1.xpose.msra.mxu0 0.0
    %1188 = vmatprep.subr.mxu0 0.0
    %1189 = vmatpush1.xpose.msra.mxu0 0.0
    %1190 = vmatprep.subr.mxu0 0.0
    %1191 = vmatpush1.xpose.msra.mxu0 0.0
    %1192 = vmatprep.subr.mxu0 0.0
    %1193 = vmatpush1.xpose.msra.mxu0 0.0
    %1194 = vmatprep.subr.mxu0 0.0
    %1195 = vmatpush1.xpose.msra.mxu0 0.0
    %1196 = vmatprep.subr.mxu0 0.0
    %1197 = vmatpush1.xpose.msra.mxu0 0.0
    %1198 = vmatprep.subr.mxu0 0.0
    %1199 = vmatpush1.xpose.msra.mxu0 0.0
    %1200 = vmatprep.subr.mxu0 0.0
    %1201 = vmatpush1.xpose.msra.mxu0 0.0
    %1202 = vmatprep.subr.mxu0 0.0
    %1203 = vmatpush1.xpose.msra.mxu0 0.0
    %1204 = vmatprep.subr.mxu0 0.0
    %1205 = vmatpush1.xpose.msra.mxu0 0.0
    %1206 = vmatprep.subr.mxu0 0.0
    %1207 = vmatpush1.xpose.msra.mxu0 0.0
    %1208 = vmatprep.subr.mxu0 0.0
    %1209 = vmatpush1.xpose.msra.mxu0 0.0
    %1210 = vmatprep.subr.mxu0 0.0
    %1211 = vmatpush1.xpose.msra.mxu0 0.0
    %1212 = vmatprep.subr.mxu0 0.0
    %1213 = vmatpush1.xpose.msra.mxu0 0.0
    %1214 = vmatprep.subr.mxu0 0.0
    %1215 = vmatpush1.xpose.msra.mxu0 0.0
    %1216 = vmatprep.subr.mxu0 0.0
    %1217 = vmatpush1.xpose.msra.mxu0 0.0
    %1218 = vmatprep.subr.mxu0 0.0
    %1219 = vmatpush1.xpose.msra.mxu0 0.0
    %1220 = vmatprep.subr.mxu0 0.0
    %1221 = vmatpush1.xpose.msra.mxu0 0.0
    %1222 = vmatprep.subr.mxu0 0.0
    %1223 = vmatpush1.xpose.msra.mxu0 0.0
    %1224 = vmatprep.subr.mxu0 0.0
    %1225 = vmatpush1.xpose.msra.mxu0 0.0
    %1226 = vmatprep.subr.mxu0 0.0
    %1227 = vmatpush1.xpose.msra.mxu0 0.0
    %1228 = vmatprep.subr.mxu0 0.0
    %1229 = vmatpush1.xpose.msra.mxu0 0.0
    %1230 = vmatprep.subr.mxu0 0.0
    %1231 = vmatpush1.xpose.msra.mxu0 0.0
    %1232 = vmatprep.subr.mxu0 0.0
    %1233 = vmatpush1.xpose.msra.mxu0 0.0
    %1234 = vmatprep.subr.mxu0 0.0
    %1235 = vmatpush1.xpose.msra.mxu0 0.0
    %1236 = vmatprep.subr.mxu0 0.0
    %1237 = vmatpush1.xpose.msra.mxu0 0.0
    %1238 = vmatprep.mubr.f32.mxu0 0.0
    %1239 = vmatmul.mubr.f32.gmra.mrb[0].mxu0 %v1170
    %v1240 = vpop.f32.mrb[0].mxu0
    %v1241 = vadd.f32 0.0, %v1240
    %v1242 = vpop.f32.mrb[0].mxu0
    %1243 = vdwg.mxu0
    %v1244 = vmul.f32 %v1241, 0.35355338
    %v1245 = vsel %vm324, %v1244, -inf
    %1246 = vmax.xlane.f32.xlu0 %v1245
    %v1247 = vpop.xlane.xlu0 %1246
    %v1248 = vsub.f32 %v1244, %v1247
    %v1249 = vmul.f32 %v1248, 1.442695
    %v1250 = vpow.pop %v1249
    %v1251 = vsel %vm324, %v1250, 0.0
    %1252 = vadd.xlane.f32.xlu0 %v1251
    %v1253 = vpop.xlane.xlu0 %1252
    %v1254 = vrcp.pop %v1253
    %v1255 = vmul.f32 %v1250, %v1254
    %1257 = vrot.lane.b32.xlu0 %v321, 120
    %v1258 = vpop.permute.xlu0 %1257
    %v1261 = vsel %vm324, %v1255, 0
    %1263 = vmatprep.subr.mxu0 0.0
    %1264 = vmatpush1.msra.mxu0 %v1258
    %1265 = vmatprep.subr.mxu0 0.0
    %1266 = vmatpush1.msra.mxu0 0.0
    %1267 = vmatprep.subr.mxu0 0.0
    %1268 = vmatpush1.msra.mxu0 0.0
    %1269 = vmatprep.subr.mxu0 0.0
    %1270 = vmatpush1.msra.mxu0 0.0
    %1271 = vmatprep.subr.mxu0 0.0
    %1272 = vmatpush1.msra.mxu0 0.0
    %1273 = vmatprep.subr.mxu0 0.0
    %1274 = vmatpush1.msra.mxu0 0.0
    %1275 = vmatprep.subr.mxu0 0.0
    %1276 = vmatpush1.msra.mxu0 0.0
    %1277 = vmatprep.subr.mxu0 0.0
    %1278 = vmatpush1.msra.mxu0 0.0
    %1279 = vmatprep.subr.mxu0 0.0
    %1280 = vmatpush1.msra.mxu0 0.0
    %1281 = vmatprep.subr.mxu0 0.0
    %1282 = vmatpush1.msra.mxu0 0.0
    %1283 = vmatprep.subr.mxu0 0.0
    %1284 = vmatpush1.msra.mxu0 0.0
    %1285 = vmatprep.subr.mxu0 0.0
    %1286 = vmatpush1.msra.mxu0 0.0
    %1287 = vmatprep.subr.mxu0 0.0
    %1288 = vmatpush1.msra.mxu0 0.0
    %1289 = vmatprep.subr.mxu0 0.0
    %1290 = vmatpush1.msra.mxu0 0.0
    %1291 = vmatprep.subr.mxu0 0.0
    %1292 = vmatpush1.msra.mxu0 0.0
    %1293 = vmatprep.subr.mxu0 0.0
    %1294 = vmatpush1.msra.mxu0 0.0
    %1295 = vmatprep.subr.mxu0 0.0
    %1296 = vmatpush1.msra.mxu0 0.0
    %1297 = vmatprep.subr.mxu0 0.0
    %1298 = vmatpush1.msra.mxu0 0.0
    %1299 = vmatprep.subr.mxu0 0.0
    %1300 = vmatpush1.msra.mxu0 0.0
    %1301 = vmatprep.subr.mxu0 0.0
    %1302 = vmatpush1.msra.mxu0 0.0
    %1303 = vmatprep.subr.mxu0 0.0
    %1304 = vmatpush1.msra.mxu0 0.0
    %1305 = vmatprep.subr.mxu0 0.0
    %1306 = vmatpush1.msra.mxu0 0.0
    %1307 = vmatprep.subr.mxu0 0.0
    %1308 = vmatpush1.msra.mxu0 0.0
    %1309 = vmatprep.subr.mxu0 0.0
    %1310 = vmatpush1.msra.mxu0 0.0
    %1311 = vmatprep.subr.mxu0 0.0
    %1312 = vmatpush1.msra.mxu0 0.0
    %1313 = vmatprep.subr.mxu0 0.0
    %1314 = vmatpush1.msra.mxu0 0.0
    %1315 = vmatprep.subr.mxu0 0.0
    %1316 = vmatpush1.msra.mxu0 0.0
    %1317 = vmatprep.subr.mxu0 0.0
    %1318 = vmatpush1.msra.mxu0 0.0
    %1319 = vmatprep.subr.mxu0 0.0
    %1320 = vmatpush1.msra.mxu0 0.0
    %1321 = vmatprep.subr.mxu0 0.0
    %1322 = vmatpush1.msra.mxu0 0.0
    %1323 = vmatprep.subr.mxu0 0.0
    %1324 = vmatpush1.msra.mxu0 0.0
    %1325 = vmatprep.subr.mxu0 0.0
    %1326 = vmatpush1.msra.mxu0 0.0
    %1327 = vmatprep.mubr.f32.mxu0 0.0
    %1328 = vmatmul.mubr.f32.gmra.mrb[0].mxu0 %v1261
    %v1329 = vpop.f32.mrb[0].mxu0
    %v1330 = vadd.f32 0.0, %v1329
    %v1331 = vpop.f32.mrb[0].mxu0
    %1332 = vdwg.mxu0
    %1334 = vrot.lane.b32.xlu0 %v1330, 8
    %v1335 = vpop.permute.xlu0 %1334
    %1337 = vst.msk [vmem:[#allocation2 + $0x8] sm:$0xff] %vm658, %v1335
    %1338 = vrot.lane.b32.xlu0 %v149, 112
    %v1339 = vpop.permute.xlu0 %1338
    %1340 = vrot.lane.b32.xlu0 %v235, 112
    %v1341 = vpop.permute.xlu0 %1340
    %v1342 = vsel %vm324, %v1339, 0
    %v1344 = vsel %vm324, %v1341, 0
    %1346 = vmatprep.subr.mxu0 0.0
    %1347 = vmatpush1.xpose.msra.mxu0 %v1344
    %1348 = vmatprep.subr.mxu0 0.0
    %1349 = vmatpush1.xpose.msra.mxu0 0.0
    %1350 = vmatprep.subr.mxu0 0.0
    %1351 = vmatpush1.xpose.msra.mxu0 0.0
    %1352 = vmatprep.subr.mxu0 0.0
    %1353 = vmatpush1.xpose.msra.mxu0 0.0
    %1354 = vmatprep.subr.mxu0 0.0
    %1355 = vmatpush1.xpose.msra.mxu0 0.0
    %1356 = vmatprep.subr.mxu0 0.0
    %1357 = vmatpush1.xpose.msra.mxu0 0.0
    %1358 = vmatprep.subr.mxu0 0.0
    %1359 = vmatpush1.xpose.msra.mxu0 0.0
    %1360 = vmatprep.subr.mxu0 0.0
    %1361 = vmatpush1.xpose.msra.mxu0 0.0
    %1362 = vmatprep.subr.mxu0 0.0
    %1363 = vmatpush1.xpose.msra.mxu0 0.0
    %1364 = vmatprep.subr.mxu0 0.0
    %1365 = vmatpush1.xpose.msra.mxu0 0.0
    %1366 = vmatprep.subr.mxu0 0.0
    %1367 = vmatpush1.xpose.msra.mxu0 0.0
    %1368 = vmatprep.subr.mxu0 0.0
    %1369 = vmatpush1.xpose.msra.mxu0 0.0
    %1370 = vmatprep.subr.mxu0 0.0
    %1371 = vmatpush1.xpose.msra.mxu0 0.0
    %1372 = vmatprep.subr.mxu0 0.0
    %1373 = vmatpush1.xpose.msra.mxu0 0.0
    %1374 = vmatprep.subr.mxu0 0.0
    %1375 = vmatpush1.xpose.msra.mxu0 0.0
    %1376 = vmatprep.subr.mxu0 0.0
    %1377 = vmatpush1.xpose.msra.mxu0 0.0
    %1378 = vmatprep.subr.mxu0 0.0
    %1379 = vmatpush1.xpose.msra.mxu0 0.0
    %1380 = vmatprep.subr.mxu0 0.0
    %1381 = vmatpush1.xpose.msra.mxu0 0.0
    %1382 = vmatprep.subr.mxu0 0.0
    %1383 = vmatpush1.xpose.msra.mxu0 0.0
    %1384 = vmatprep.subr.mxu0 0.0
    %1385 = vmatpush1.xpose.msra.mxu0 0.0
    %1386 = vmatprep.subr.mxu0 0.0
    %1387 = vmatpush1.xpose.msra.mxu0 0.0
    %1388 = vmatprep.subr.mxu0 0.0
    %1389 = vmatpush1.xpose.msra.mxu0 0.0
    %1390 = vmatprep.subr.mxu0 0.0
    %1391 = vmatpush1.xpose.msra.mxu0 0.0
    %1392 = vmatprep.subr.mxu0 0.0
    %1393 = vmatpush1.xpose.msra.mxu0 0.0
    %1394 = vmatprep.subr.mxu0 0.0
    %1395 = vmatpush1.xpose.msra.mxu0 0.0
    %1396 = vmatprep.subr.mxu0 0.0
    %1397 = vmatpush1.xpose.msra.mxu0 0.0
    %1398 = vmatprep.subr.mxu0 0.0
    %1399 = vmatpush1.xpose.msra.mxu0 0.0
    %1400 = vmatprep.subr.mxu0 0.0
    %1401 = vmatpush1.xpose.msra.mxu0 0.0
    %1402 = vmatprep.subr.mxu0 0.0
    %1403 = vmatpush1.xpose.msra.mxu0 0.0
    %1404 = vmatprep.subr.mxu0 0.0
    %1405 = vmatpush1.xpose.msra.mxu0 0.0
    %1406 = vmatprep.subr.mxu0 0.0
    %1407 = vmatpush1.xpose.msra.mxu0 0.0
    %1408 = vmatprep.subr.mxu0 0.0
    %1409 = vmatpush1.xpose.msra.mxu0 0.0
    %1410 = vmatprep.mubr.f32.mxu0 0.0
    %1411 = vmatmul.mubr.f32.gmra.mrb[0].mxu0 %v1342
    %v1412 = vpop.f32.mrb[0].mxu0
    %v1413 = vadd.f32 0.0, %v1412
    %v1414 = vpop.f32.mrb[0].mxu0
    %1415 = vdwg.mxu0
    %v1416 = vmul.f32 %v1413, 0.35355338
    %v1417 = vsel %vm324, %v1416, -inf
    %1418 = vmax.xlane.f32.xlu0 %v1417
    %v1419 = vpop.xlane.xlu0 %1418
    %v1420 = vsub.f32 %v1416, %v1419
    %v1421 = vmul.f32 %v1420, 1.442695
    %v1422 = vpow.pop %v1421
    %v1423 = vsel %vm324, %v1422, 0.0
    %1424 = vadd.xlane.f32.xlu0 %v1423
    %v1425 = vpop.xlane.xlu0 %1424
    %v1426 = vrcp.pop %v1425
    %v1427 = vmul.f32 %v1422, %v1426
    %1428 = vrot.lane.b32.xlu0 %v321, 112
    %v1429 = vpop.permute.xlu0 %1428
    %v1432 = vsel %vm324, %v1427, 0
    %1434 = vmatprep.subr.mxu0 0.0
    %1435 = vmatpush1.msra.mxu0 %v1429
    %1436 = vmatprep.subr.mxu0 0.0
    %1437 = vmatpush1.msra.mxu0 0.0
    %1438 = vmatprep.subr.mxu0 0.0
    %1439 = vmatpush1.msra.mxu0 0.0
    %1440 = vmatprep.subr.mxu0 0.0
    %1441 = vmatpush1.msra.mxu0 0.0
    %1442 = vmatprep.subr.mxu0 0.0
    %1443 = vmatpush1.msra.mxu0 0.0
    %1444 = vmatprep.subr.mxu0 0.0
    %1445 = vmatpush1.msra.mxu0 0.0
    %1446 = vmatprep.subr.mxu0 0.0
    %1447 = vmatpush1.msra.mxu0 0.0
    %1448 = vmatprep.subr.mxu0 0.0
    %1449 = vmatpush1.msra.mxu0 0.0
    %1450 = vmatprep.subr.mxu0 0.0
    %1451 = vmatpush1.msra.mxu0 0.0
    %1452 = vmatprep.subr.mxu0 0.0
    %1453 = vmatpush1.msra.mxu0 0.0
    %1454 = vmatprep.subr.mxu0 0.0
    %1455 = vmatpush1.msra.mxu0 0.0
    %1456 = vmatprep.subr.mxu0 0.0
    %1457 = vmatpush1.msra.mxu0 0.0
    %1458 = vmatprep.subr.mxu0 0.0
    %1459 = vmatpush1.msra.mxu0 0.0
    %1460 = vmatprep.subr.mxu0 0.0
    %1461 = vmatpush1.msra.mxu0 0.0
    %1462 = vmatprep.subr.mxu0 0.0
    %1463 = vmatpush1.msra.mxu0 0.0
    %1464 = vmatprep.subr.mxu0 0.0
    %1465 = vmatpush1.msra.mxu0 0.0
    %1466 = vmatprep.subr.mxu0 0.0
    %1467 = vmatpush1.msra.mxu0 0.0
    %1468 = vmatprep.subr.mxu0 0.0
    %1469 = vmatpush1.msra.mxu0 0.0
    %1470 = vmatprep.subr.mxu0 0.0
    %1471 = vmatpush1.msra.mxu0 0.0
    %1472 = vmatprep.subr.mxu0 0.0
    %1473 = vmatpush1.msra.mxu0 0.0
    %1474 = vmatprep.subr.mxu0 0.0
    %1475 = vmatpush1.msra.mxu0 0.0
    %1476 = vmatprep.subr.mxu0 0.0
    %1477 = vmatpush1.msra.mxu0 0.0
    %1478 = vmatprep.subr.mxu0 0.0
    %1479 = vmatpush1.msra.mxu0 0.0
    %1480 = vmatprep.subr.mxu0 0.0
    %1481 = vmatpush1.msra.mxu0 0.0
    %1482 = vmatprep.subr.mxu0 0.0
    %1483 = vmatpush1.msra.mxu0 0.0
    %1484 = vmatprep.subr.mxu0 0.0
    %1485 = vmatpush1.msra.mxu0 0.0
    %1486 = vmatprep.subr.mxu0 0.0
    %1487 = vmatpush1.msra.mxu0 0.0
    %1488 = vmatprep.subr.mxu0 0.0
    %1489 = vmatpush1.msra.mxu0 0.0
    %1490 = vmatprep.subr.mxu0 0.0
    %1491 = vmatpush1.msra.mxu0 0.0
    %1492 = vmatprep.subr.mxu0 0.0
    %1493 = vmatpush1.msra.mxu0 0.0
    %1494 = vmatprep.subr.mxu0 0.0
    %1495 = vmatpush1.msra.mxu0 0.0
    %1496 = vmatprep.subr.mxu0 0.0
    %1497 = vmatpush1.msra.mxu0 0.0
    %1498 = vmatprep.mubr.f32.mxu0 0.0
    %1499 = vmatmul.mubr.f32.gmra.mrb[0].mxu0 %v1432
    %v1500 = vpop.f32.mrb[0].mxu0
    %v1501 = vadd.f32 0.0, %v1500
    %v1502 = vpop.f32.mrb[0].mxu0
    %1503 = vdwg.mxu0
    %1505 = vrot.lane.b32.xlu0 %v1501, 16
    %v1506 = vpop.permute.xlu0 %1505
    %1508 = vst.msk [vmem:[#allocation2 + $0x8] sm:$0xff] %vm830, %v1506
    %1509 = vrot.lane.b32.xlu0 %v149, 104
    %v1510 = vpop.permute.xlu0 %1509
    %1511 = vrot.lane.b32.xlu0 %v235, 104
    %v1512 = vpop.permute.xlu0 %1511
    %v1513 = vsel %vm324, %v1510, 0
    %v1515 = vsel %vm324, %v1512, 0
    %1517 = vmatprep.subr.mxu0 0.0
    %1518 = vmatpush1.xpose.msra.mxu0 %v1515
    %1519 = vmatprep.subr.mxu0 0.0
    %1520 = vmatpush1.xpose.msra.mxu0 0.0
    %1521 = vmatprep.subr.mxu0 0.0
    %1522 = vmatpush1.xpose.msra.mxu0 0.0
    %1523 = vmatprep.subr.mxu0 0.0
    %1524 = vmatpush1.xpose.msra.mxu0 0.0
    %1525 = vmatprep.subr.mxu0 0.0
    %1526 = vmatpush1.xpose.msra.mxu0 0.0
    %1527 = vmatprep.subr.mxu0 0.0
    %1528 = vmatpush1.xpose.msra.mxu0 0.0
    %1529 = vmatprep.subr.mxu0 0.0
    %1530 = vmatpush1.xpose.msra.mxu0 0.0
    %1531 = vmatprep.subr.mxu0 0.0
    %1532 = vmatpush1.xpose.msra.mxu0 0.0
    %1533 = vmatprep.subr.mxu0 0.0
    %1534 = vmatpush1.xpose.msra.mxu0 0.0
    %1535 = vmatprep.subr.mxu0 0.0
    %1536 = vmatpush1.xpose.msra.mxu0 0.0
    %1537 = vmatprep.subr.mxu0 0.0
    %1538 = vmatpush1.xpose.msra.mxu0 0.0
    %1539 = vmatprep.subr.mxu0 0.0
    %1540 = vmatpush1.xpose.msra.mxu0 0.0
    %1541 = vmatprep.subr.mxu0 0.0
    %1542 = vmatpush1.xpose.msra.mxu0 0.0
    %1543 = vmatprep.subr.mxu0 0.0
    %1544 = vmatpush1.xpose.msra.mxu0 0.0
    %1545 = vmatprep.subr.mxu0 0.0
    %1546 = vmatpush1.xpose.msra.mxu0 0.0
    %1547 = vmatprep.subr.mxu0 0.0
    %1548 = vmatpush1.xpose.msra.mxu0 0.0
    %1549 = vmatprep.subr.mxu0 0.0
    %1550 = vmatpush1.xpose.msra.mxu0 0.0
    %1551 = vmatprep.subr.mxu0 0.0
    %1552 = vmatpush1.xpose.msra.mxu0 0.0
    %1553 = vmatprep.subr.mxu0 0.0
    %1554 = vmatpush1.xpose.msra.mxu0 0.0
    %1555 = vmatprep.subr.mxu0 0.0
    %1556 = vmatpush1.xpose.msra.mxu0 0.0
    %1557 = vmatprep.subr.mxu0 0.0
    %1558 = vmatpush1.xpose.msra.mxu0 0.0
    %1559 = vmatprep.subr.mxu0 0.0
    %1560 = vmatpush1.xpose.msra.mxu0 0.0
    %1561 = vmatprep.subr.mxu0 0.0
    %1562 = vmatpush1.xpose.msra.mxu0 0.0
    %1563 = vmatprep.subr.mxu0 0.0
    %1564 = vmatpush1.xpose.msra.mxu0 0.0
    %1565 = vmatprep.subr.mxu0 0.0
    %1566 = vmatpush1.xpose.msra.mxu0 0.0
    %1567 = vmatprep.subr.mxu0 0.0
    %1568 = vmatpush1.xpose.msra.mxu0 0.0
    %1569 = vmatprep.subr.mxu0 0.0
    %1570 = vmatpush1.xpose.msra.mxu0 0.0
    %1571 = vmatprep.subr.mxu0 0.0
    %1572 = vmatpush1.xpose.msra.mxu0 0.0
    %1573 = vmatprep.subr.mxu0 0.0
    %1574 = vmatpush1.xpose.msra.mxu0 0.0
    %1575 = vmatprep.subr.mxu0 0.0
    %1576 = vmatpush1.xpose.msra.mxu0 0.0
    %1577 = vmatprep.subr.mxu0 0.0
    %1578 = vmatpush1.xpose.msra.mxu0 0.0
    %1579 = vmatprep.subr.mxu0 0.0
    %1580 = vmatpush1.xpose.msra.mxu0 0.0
    %1581 = vmatprep.mubr.f32.mxu0 0.0
    %1582 = vmatmul.mubr.f32.gmra.mrb[0].mxu0 %v1513
    %v1583 = vpop.f32.mrb[0].mxu0
    %v1584 = vadd.f32 0.0, %v1583
    %v1585 = vpop.f32.mrb[0].mxu0
    %1586 = vdwg.mxu0
    %v1587 = vmul.f32 %v1584, 0.35355338
    %v1588 = vsel %vm324, %v1587, -inf
    %1589 = vmax.xlane.f32.xlu0 %v1588
    %v1590 = vpop.xlane.xlu0 %1589
    %v1591 = vsub.f32 %v1587, %v1590
    %v1592 = vmul.f32 %v1591, 1.442695
    %v1593 = vpow.pop %v1592
    %v1594 = vsel %vm324, %v1593, 0.0
    %1595 = vadd.xlane.f32.xlu0 %v1594
    %v1596 = vpop.xlane.xlu0 %1595
    %v1597 = vrcp.pop %v1596
    %v1598 = vmul.f32 %v1593, %v1597
    %1599 = vrot.lane.b32.xlu0 %v321, 104
    %v1600 = vpop.permute.xlu0 %1599
    %v1603 = vsel %vm324, %v1598, 0
    %1605 = vmatprep.subr.mxu0 0.0
    %1606 = vmatpush1.msra.mxu0 %v1600
    %1607 = vmatprep.subr.mxu0 0.0
    %1608 = vmatpush1.msra.mxu0 0.0
    %1609 = vmatprep.subr.mxu0 0.0
    %1610 = vmatpush1.msra.mxu0 0.0
    %1611 = vmatprep.subr.mxu0 0.0
    %1612 = vmatpush1.msra.mxu0 0.0
    %1613 = vmatprep.subr.mxu0 0.0
    %1614 = vmatpush1.msra.mxu0 0.0
    %1615 = vmatprep.subr.mxu0 0.0
    %1616 = vmatpush1.msra.mxu0 0.0
    %1617 = vmatprep.subr.mxu0 0.0
    %1618 = vmatpush1.msra.mxu0 0.0
    %1619 = vmatprep.subr.mxu0 0.0
    %1620 = vmatpush1.msra.mxu0 0.0
    %1621 = vmatprep.subr.mxu0 0.0
    %1622 = vmatpush1.msra.mxu0 0.0
    %1623 = vmatprep.subr.mxu0 0.0
    %1624 = vmatpush1.msra.mxu0 0.0
    %1625 = vmatprep.subr.mxu0 0.0
    %1626 = vmatpush1.msra.mxu0 0.0
    %1627 = vmatprep.subr.mxu0 0.0
    %1628 = vmatpush1.msra.mxu0 0.0
    %1629 = vmatprep.subr.mxu0 0.0
    %1630 = vmatpush1.msra.mxu0 0.0
    %1631 = vmatprep.subr.mxu0 0.0
    %1632 = vmatpush1.msra.mxu0 0.0
    %1633 = vmatprep.subr.mxu0 0.0
    %1634 = vmatpush1.msra.mxu0 0.0
    %1635 = vmatprep.subr.mxu0 0.0
    %1636 = vmatpush1.msra.mxu0 0.0
    %1637 = vmatprep.subr.mxu0 0.0
    %1638 = vmatpush1.msra.mxu0 0.0
    %1639 = vmatprep.subr.mxu0 0.0
    %1640 = vmatpush1.msra.mxu0 0.0
    %1641 = vmatprep.subr.mxu0 0.0
    %1642 = vmatpush1.msra.mxu0 0.0
    %1643 = vmatprep.subr.mxu0 0.0
    %1644 = vmatpush1.msra.mxu0 0.0
    %1645 = vmatprep.subr.mxu0 0.0
    %1646 = vmatpush1.msra.mxu0 0.0
    %1647 = vmatprep.subr.mxu0 0.0
    %1648 = vmatpush1.msra.mxu0 0.0
    %1649 = vmatprep.subr.mxu0 0.0
    %1650 = vmatpush1.msra.mxu0 0.0
    %1651 = vmatprep.subr.mxu0 0.0
    %1652 = vmatpush1.msra.mxu0 0.0
    %1653 = vmatprep.subr.mxu0 0.0
    %1654 = vmatpush1.msra.mxu0 0.0
    %1655 = vmatprep.subr.mxu0 0.0
    %1656 = vmatpush1.msra.mxu0 0.0
    %1657 = vmatprep.subr.mxu0 0.0
    %1658 = vmatpush1.msra.mxu0 0.0
    %1659 = vmatprep.subr.mxu0 0.0
    %1660 = vmatpush1.msra.mxu0 0.0
    %1661 = vmatprep.subr.mxu0 0.0
    %1662 = vmatpush1.msra.mxu0 0.0
    %1663 = vmatprep.subr.mxu0 0.0
    %1664 = vmatpush1.msra.mxu0 0.0
    %1665 = vmatprep.subr.mxu0 0.0
    %1666 = vmatpush1.msra.mxu0 0.0
    %1667 = vmatprep.subr.mxu0 0.0
    %1668 = vmatpush1.msra.mxu0 0.0
    %1669 = vmatprep.mubr.f32.mxu0 0.0
    %1670 = vmatmul.mubr.f32.gmra.mrb[0].mxu0 %v1603
    %v1671 = vpop.f32.mrb[0].mxu0
    %v1672 = vadd.f32 0.0, %v1671
    %v1673 = vpop.f32.mrb[0].mxu0
    %1674 = vdwg.mxu0
    %1676 = vrot.lane.b32.xlu0 %v1672, 24
    %v1677 = vpop.permute.xlu0 %1676
    %1679 = vst.msk [vmem:[#allocation2 + $0x8] sm:$0xff] %vm1002, %v1677
    %v1680 = vld [vmem:[#allocation2] sm:$0xff]
    %v1681 = vld [vmem:[#allocation2 + $0x8] sm:$0xff]
    %v1682 = vld [vmem:[%s7] sm:$0xff]
    %v1683 = vld [vmem:[%s7 + $0x8] sm:$0xff]
    %v1684 = vld [vmem:[%s7 + $0x10] sm:$0xff]
    %v1685 = vld [vmem:[%s7 + $0x18] sm:$0xff]
    %v1686 = vld [vmem:[%s8] sm:$0x1]
    %v1688 = vlaneseq
    %v1689 = vshrl.u32 %v1688, 7
    %v1690 = vsub.s32 0, %v1689
    %v1691 = vrot.slane %v1686, %v1690
    %v1694 = vsel %vm70, %v1680, 0
    %v1697 = vsel %vm70, %v1681, 0
    %1699 = vmatprep.subr.mxu0 0.0
    %1700 = vmatpush1.msra.mxu0 %v1682
    %1701 = vmatprep.subr.mxu0 0.0
    %1702 = vmatpush1.msra.mxu0 %v1683
    %1703 = vmatprep.subr.mxu0 0.0
    %1704 = vmatpush1.msra.mxu0 %v1684
    %1705 = vmatprep.subr.mxu0 0.0
    %1706 = vmatpush1.msra.mxu0 %v1685
    %1707 = vmatprep.subr.mxu0 0.0
    %1708 = vmatpush1.msra.mxu0 0.0
    %1709 = vmatprep.subr.mxu0 0.0
    %1710 = vmatpush1.msra.mxu0 0.0
    %1711 = vmatprep.subr.mxu0 0.0
    %1712 = vmatpush1.msra.mxu0 0.0
    %1713 = vmatprep.subr.mxu0 0.0
    %1714 = vmatpush1.msra.mxu0 0.0
    %1715 = vmatprep.subr.mxu0 0.0
    %1716 = vmatpush1.msra.mxu0 0.0
    %1717 = vmatprep.subr.mxu0 0.0
    %1718 = vmatpush1.msra.mxu0 0.0
    %1719 = vmatprep.subr.mxu0 0.0
    %1720 = vmatpush1.msra.mxu0 0.0
    %1721 = vmatprep.subr.mxu0 0.0
    %1722 = vmatpush1.msra.mxu0 0.0
    %1723 = vmatprep.subr.mxu0 0.0
    %1724 = vmatpush1.msra.mxu0 0.0
    %1725 = vmatprep.subr.mxu0 0.0
    %1726 = vmatpush1.msra.mxu0 0.0
    %1727 = vmatprep.subr.mxu0 0.0
    %1728 = vmatpush1.msra.mxu0 0.0
    %1729 = vmatprep.subr.mxu0 0.0
    %1730 = vmatpush1.msra.mxu0 0.0
    %1731 = vmatprep.subr.mxu0 0.0
    %1732 = vmatpush1.msra.mxu0 0.0
    %1733 = vmatprep.subr.mxu0 0.0
    %1734 = vmatpush1.msra.mxu0 0.0
    %1735 = vmatprep.subr.mxu0 0.0
    %1736 = vmatpush1.msra.mxu0 0.0
    %1737 = vmatprep.subr.mxu0 0.0
    %1738 = vmatpush1.msra.mxu0 0.0
    %1739 = vmatprep.subr.mxu0 0.0
    %1740 = vmatpush1.msra.mxu0 0.0
    %1741 = vmatprep.subr.mxu0 0.0
    %1742 = vmatpush1.msra.mxu0 0.0
    %1743 = vmatprep.subr.mxu0 0.0
    %1744 = vmatpush1.msra.mxu0 0.0
    %1745 = vmatprep.subr.mxu0 0.0
    %1746 = vmatpush1.msra.mxu0 0.0
    %1747 = vmatprep.subr.mxu0 0.0
    %1748 = vmatpush1.msra.mxu0 0.0
    %1749 = vmatprep.subr.mxu0 0.0
    %1750 = vmatpush1.msra.mxu0 0.0
    %1751 = vmatprep.subr.mxu0 0.0
    %1752 = vmatpush1.msra.mxu0 0.0
    %1753 = vmatprep.subr.mxu0 0.0
    %1754 = vmatpush1.msra.mxu0 0.0
    %1755 = vmatprep.subr.mxu0 0.0
    %1756 = vmatpush1.msra.mxu0 0.0
    %1757 = vmatprep.subr.mxu0 0.0
    %1758 = vmatpush1.msra.mxu0 0.0
    %1759 = vmatprep.subr.mxu0 0.0
    %1760 = vmatpush1.msra.mxu0 0.0
    %1761 = vmatprep.subr.mxu0 0.0
    %1762 = vmatpush1.msra.mxu0 0.0
    %1763 = vmatprep.mubr.f32.mxu0 0.0
    %1764 = vmatmul.mubr.f32.gmra.mrb[0].mxu0 %v1694
    %v1765 = vpop.f32.mrb[0].mxu0
    %v1766 = vadd.f32 %v1691, %v1765
    %v1767 = vpop.f32.mrb[0].mxu0
    %1768 = vmatprep.mubr.f32.mxu0 0.0
    %1769 = vmatmul.mubr.f32.gmra.mrb[0].mxu0 %v1697
    %v1770 = vpop.f32.mrb[0].mxu0
    %v1771 = vadd.f32 %v1691, %v1770
    %v1772 = vpop.f32.mrb[0].mxu0
    %1773 = vdwg.mxu0
    %v1774 = vadd.f32 %v57, %v1766
    %v1775 = vadd.f32 %v58, %v1771
    %v1776 = vld [vmem:[%s9] sm:$0xff]
    %v1777 = vld [vmem:[%s9 + $0x8] sm:$0xff]
    %v1778 = vld [vmem:[%s10] sm:$0xff]
    %v1779 = vld [vmem:[%s10 + $0x8] sm:$0xff]
    %v1780 = vsel %vm70, %v1774, 0.0
    %1781 = vadd.xlane.f32.xlu0 %v1780
    %v1782 = vpop.xlane.xlu0 %1781
    %v1783 = vrot.slane %v1782, 4
    %v1784 = vadd.f32 %v1782, %v1783
    %v1785 = vrot.slane %v1784, 2
    %v1786 = vadd.f32 %v1784, %v1785
    %v1787 = vrot.slane %v1786, 1
    %v1788 = vadd.f32 %v1786, %v1787
    %s1789 = vtos %v1788
    %v1790 = vstv %s1789
    %v1791 = vmul.f32 %v1774, %v1774
    %v1792 = vsel %vm70, %v1791, 0.0
    %1793 = vadd.xlane.f32.xlu0 %v1792
    %v1794 = vpop.xlane.xlu0 %1793
    %v1795 = vrot.slane %v1794, 4
    %v1796 = vadd.f32 %v1794, %v1795
    %v1797 = vrot.slane %v1796, 2
    %v1798 = vadd.f32 %v1796, %v1797
    %v1799 = vrot.slane %v1798, 1
    %v1800 = vadd.f32 %v1798, %v1799
    %s1801 = vtos %v1800
    %v1802 = vstv %s1801
    %v1803 = vmul.f32 %v1790, 0.00390625
    %v1804 = vmul.f32 %v1802, 0.00390625
    %v1805 = vmul.f32 %v1803, %v1803
    %v1806 = vsub.f32 %v1804, %v1805
    %v1807 = vsub.f32 %v1774, %v1803
    %v1808 = vadd.f32 %v1806, 1e-05
    %v1809 = vrsqrt.pop %v1808
    %v1810 = vmul.f32 %v1807, %v1809
    %v1811 = vsel %vm70, %v1775, 0.0
    %1812 = vadd.xlane.f32.xlu0 %v1811
    %v1813 = vpop.xlane.xlu0 %1812
    %v1814 = vrot.slane %v1813, 4
    %v1815 = vadd.f32 %v1813, %v1814
    %v1816 = vrot.slane %v1815, 2
    %v1817 = vadd.f32 %v1815, %v1816
    %v1818 = vrot.slane %v1817, 1
    %v1819 = vadd.f32 %v1817, %v1818
    %s1820 = vtos %v1819
    %v1821 = vstv %s1820
    %v1822 = vmul.f32 %v1775, %v1775
    %v1823 = vsel %vm70, %v1822, 0.0
    %1824 = vadd.xlane.f32.xlu0 %v1823
    %v1825 = vpop.xlane.xlu0 %1824
    %v1826 = vrot.slane %v1825, 4
    %v1827 = vadd.f32 %v1825, %v1826
    %v1828 = vrot.slane %v1827, 2
    %v1829 = vadd.f32 %v1827, %v1828
    %v1830 = vrot.slane %v1829, 1
    %v1831 = vadd.f32 %v1829, %v1830
    %s1832 = vtos %v1831
    %v1833 = vstv %s1832
    %v1834 = vmul.f32 %v1821, 0.00390625
    %v1835 = vmul.f32 %v1833, 0.00390625
    %v1836 = vmul.f32 %v1834, %v1834
    %v1837 = vsub.f32 %v1835, %v1836
    %v1838 = vsub.f32 %v1775, %v1834
    %v1839 = vadd.f32 %v1837, 1e-05
    %v1840 = vrsqrt.pop %v1839
    %v1841 = vmul.f32 %v1838, %v1840
    %v1842 = vmul.f32 %v1810, %v1776
    %v1843 = vmul.f32 %v1841, %v1777
    %v1844 = vadd.f32 %v1842, %v1778
    %v1845 = vadd.f32 %v1843, %v1779
    %v1846 = vld [vmem:[%s11] sm:$0xff]
    %v1847 = vld [vmem:[%s11 + $0x8] sm:$0xff]
    %v1848 = vld [vmem:[%s11 + $0x10] sm:$0xff]
    %v1849 = vld [vmem:[%s11 + $0x18] sm:$0xff]
    %v1850 = vld [vmem:[%s12] sm:$0x1]
    %v1852 = vlaneseq
    %v1853 = vshrl.u32 %v1852, 7
    %v1854 = vsub.s32 0, %v1853
    %v1855 = vrot.slane %v1850, %v1854
    %v1858 = vsel %vm70, %v1844, 0
    %v1861 = vsel %vm70, %v1845, 0
    %1863 = vmatprep.subr.mxu0 0.0
    %1864 = vmatpush1.msra.mxu0 %v1846
    %1865 = vmatprep.subr.mxu0 0.0
    %1866 = vmatpush1.msra.mxu0 %v1847
    %1867 = vmatprep.subr.mxu0 0.0
    %1868 = vmatpush1.msra.mxu0 %v1848
    %1869 = vmatprep.subr.mxu0 0.0
    %1870 = vmatpush1.msra.mxu0 %v1849
    %1871 = vmatprep.subr.mxu0 0.0
    %1872 = vmatpush1.msra.mxu0 0.0
    %1873 = vmatprep.subr.mxu0 0.0
    %1874 = vmatpush1.msra.mxu0 0.0
    %1875 = vmatprep.subr.mxu0 0.0
    %1876 = vmatpush1.msra.mxu0 0.0
    %1877 = vmatprep.subr.mxu0 0.0
    %1878 = vmatpush1.msra.mxu0 0.0
    %1879 = vmatprep.subr.mxu0 0.0
    %1880 = vmatpush1.msra.mxu0 0.0
    %1881 = vmatprep.subr.mxu0 0.0
    %1882 = vmatpush1.msra.mxu0 0.0
    %1883 = vmatprep.subr.mxu0 0.0
    %1884 = vmatpush1.msra.mxu0 0.0
    %1885 = vmatprep.subr.mxu0 0.0
    %1886 = vmatpush1.msra.mxu0 0.0
    %1887 = vmatprep.subr.mxu0 0.0
    %1888 = vmatpush1.msra.mxu0 0.0
    %1889 = vmatprep.subr.mxu0 0.0
    %1890 = vmatpush1.msra.mxu0 0.0
    %1891 = vmatprep.subr.mxu0 0.0
    %1892 = vmatpush1.msra.mxu0 0.0
    %1893 = vmatprep.subr.mxu0 0.0
    %1894 = vmatpush1.msra.mxu0 0.0
    %1895 = vmatprep.subr.mxu0 0.0
    %1896 = vmatpush1.msra.mxu0 0.0
    %1897 = vmatprep.subr.mxu0 0.0
    %1898 = vmatpush1.msra.mxu0 0.0
    %1899 = vmatprep.subr.mxu0 0.0
    %1900 = vmatpush1.msra.mxu0 0.0
    %1901 = vmatprep.subr.mxu0 0.0
    %1902 = vmatpush1.msra.mxu0 0.0
    %1903 = vmatprep.subr.mxu0 0.0
    %1904 = vmatpush1.msra.mxu0 0.0
    %1905 = vmatprep.subr.mxu0 0.0
    %1906 = vmatpush1.msra.mxu0 0.0
    %1907 = vmatprep.subr.mxu0 0.0
    %1908 = vmatpush1.msra.mxu0 0.0
    %1909 = vmatprep.subr.mxu0 0.0
    %1910 = vmatpush1.msra.mxu0 0.0
    %1911 = vmatprep.subr.mxu0 0.0
    %1912 = vmatpush1.msra.mxu0 0.0
    %1913 = vmatprep.subr.mxu0 0.0
    %1914 = vmatpush1.msra.mxu0 0.0
    %1915 = vmatprep.subr.mxu0 0.0
    %1916 = vmatpush1.msra.mxu0 0.0
    %1917 = vmatprep.subr.mxu0 0.0
    %1918 = vmatpush1.msra.mxu0 0.0
    %1919 = vmatprep.subr.mxu0 0.0
    %1920 = vmatpush1.msra.mxu0 0.0
    %1921 = vmatprep.subr.mxu0 0.0
    %1922 = vmatpush1.msra.mxu0 0.0
    %1923 = vmatprep.subr.mxu0 0.0
    %1924 = vmatpush1.msra.mxu0 0.0
    %1925 = vmatprep.subr.mxu0 0.0
    %1926 = vmatpush1.msra.mxu0 0.0
    %1927 = vmatprep.mubr.f32.mxu0 0.0
    %1928 = vmatmul.mubr.f32.gmra.mrb[0].mxu0 %v1858
    %v1929 = vpop.f32.mrb[0].mxu0
    %v1930 = vadd.f32 %v1855, %v1929
    %v1931 = vpop.f32.mrb[0].mxu0
    %1932 = vmatprep.mubr.f32.mxu0 0.0
    %1933 = vmatmul.mubr.f32.gmra.mrb[0].mxu0 %v1861
    %v1934 = vpop.f32.mrb[0].mxu0
    %v1935 = vadd.f32 %v1855, %v1934
    %v1936 = vpop.f32.mrb[0].mxu0
    %1937 = vdwg.mxu0
    %v1938 = vmax.f32 %v1930, 0.0
    %v1939 = vmax.f32 %v1935, 0.0
    %v1940 = vld [vmem:[%s13] sm:$0xff]
    %v1941 = vld [vmem:[%s13 + $0x8] sm:$0xff]
    %v1942 = vld [vmem:[%s13 + $0x10] sm:$0xff]
    %v1943 = vld [vmem:[%s13 + $0x18] sm:$0xff]
    %v1944 = vld [vmem:[%s13 + $0x20] sm:$0xff]
    %v1945 = vld [vmem:[%s13 + $0x28] sm:$0xff]
    %v1946 = vld [vmem:[%s13 + $0x30] sm:$0xff]
    %v1947 = vld [vmem:[%s13 + $0x38] sm:$0xff]
    %v1948 = vld [vmem:[%s13 + $0x40] sm:$0xff]
    %v1949 = vld [vmem:[%s13 + $0x48] sm:$0xff]
    %v1950 = vld [vmem:[%s13 + $0x50] sm:$0xff]
    %v1951 = vld [vmem:[%s13 + $0x58] sm:$0xff]
    %v1952 = vld [vmem:[%s13 + $0x60] sm:$0xff]
    %v1953 = vld [vmem:[%s13 + $0x68] sm:$0xff]
    %v1954 = vld [vmem:[%s13 + $0x70] sm:$0xff]
    %v1955 = vld [vmem:[%s13 + $0x78] sm:$0xff]
    %v1956 = vld [vmem:[%s14] sm:$0x1]
    %v1958 = vlaneseq
    %v1959 = vshrl.u32 %v1958, 7
    %v1960 = vsub.s32 0, %v1959
    %v1961 = vrot.slane %v1956, %v1960
    %1963 = vmatprep.subr.mxu0 0.0
    %1964 = vmatpush1.msra.mxu0 %v1940
    %1965 = vmatprep.subr.mxu0 0.0
    %1966 = vmatpush1.msra.mxu0 %v1941
    %1967 = vmatprep.subr.mxu0 0.0
    %1968 = vmatpush1.msra.mxu0 %v1942
    %1969 = vmatprep.subr.mxu0 0.0
    %1970 = vmatpush1.msra.mxu0 %v1943
    %1971 = vmatprep.subr.mxu0 0.0
    %1972 = vmatpush1.msra.mxu0 %v1944
    %1973 = vmatprep.subr.mxu0 0.0
    %1974 = vmatpush1.msra.mxu0 %v1945
    %1975 = vmatprep.subr.mxu0 0.0
    %1976 = vmatpush1.msra.mxu0 %v1946
    %1977 = vmatprep.subr.mxu0 0.0
    %1978 = vmatpush1.msra.mxu0 %v1947
    %1979 = vmatprep.subr.mxu0 0.0
    %1980 = vmatpush1.msra.mxu0 %v1948
    %1981 = vmatprep.subr.mxu0 0.0
    %1982 = vmatpush1.msra.mxu0 %v1949
    %1983 = vmatprep.subr.mxu0 0.0
    %1984 = vmatpush1.msra.mxu0 %v1950
    %1985 = vmatprep.subr.mxu0 0.0
    %1986 = vmatpush1.msra.mxu0 %v1951
    %1987 = vmatprep.subr.mxu0 0.0
    %1988 = vmatpush1.msra.mxu0 %v1952
    %1989 = vmatprep.subr.mxu0 0.0
    %1990 = vmatpush1.msra.mxu0 %v1953
    %1991 = vmatprep.subr.mxu0 0.0
    %1992 = vmatpush1.msra.mxu0 %v1954
    %1993 = vmatprep.subr.mxu0 0.0
    %1994 = vmatpush1.msra.mxu0 %v1955
    %1995 = vmatprep.subr.mxu0 0.0
    %1996 = vmatpush1.msra.mxu0 0.0
    %1997 = vmatprep.subr.mxu0 0.0
    %1998 = vmatpush1.msra.mxu0 0.0
    %1999 = vmatprep.subr.mxu0 0.0
    %2000 = vmatpush1.msra.mxu0 0.0
    %2001 = vmatprep.subr.mxu0 0.0
    %2002 = vmatpush1.msra.mxu0 0.0
    %2003 = vmatprep.subr.mxu0 0.0
    %2004 = vmatpush1.msra.mxu0 0.0
    %2005 = vmatprep.subr.mxu0 0.0
    %2006 = vmatpush1.msra.mxu0 0.0
    %2007 = vmatprep.subr.mxu0 0.0
    %2008 = vmatpush1.msra.mxu0 0.0
    %2009 = vmatprep.subr.mxu0 0.0
    %2010 = vmatpush1.msra.mxu0 0.0
    %2011 = vmatprep.subr.mxu0 0.0
    %2012 = vmatpush1.msra.mxu0 0.0
    %2013 = vmatprep.subr.mxu0 0.0
    %2014 = vmatpush1.msra.mxu0 0.0
    %2015 = vmatprep.subr.mxu0 0.0
    %2016 = vmatpush1.msra.mxu0 0.0
    %2017 = vmatprep.subr.mxu0 0.0
    %2018 = vmatpush1.msra.mxu0 0.0
    %2019 = vmatprep.subr.mxu0 0.0
    %2020 = vmatpush1.msra.mxu0 0.0
    %2021 = vmatprep.subr.mxu0 0.0
    %2022 = vmatpush1.msra.mxu0 0.0
    %2023 = vmatprep.subr.mxu0 0.0
    %2024 = vmatpush1.msra.mxu0 0.0
    %2025 = vmatprep.subr.mxu0 0.0
    %2026 = vmatpush1.msra.mxu0 0.0
    %2027 = vmatprep.mubr.f32.mxu0 0.0
    %2028 = vmatmul.mubr.f32.gmra.mrb[0].mxu0 %v1938
    %v2029 = vpop.f32.mrb[0].mxu0
    %v2030 = vadd.f32 %v1961, %v2029
    %v2031 = vpop.f32.mrb[0].mxu0
    %2032 = vmatprep.mubr.f32.mxu0 0.0
    %2033 = vmatmul.mubr.f32.gmra.mrb[0].mxu0 %v1939
    %v2034 = vpop.f32.mrb[0].mxu0
    %v2035 = vadd.f32 %v1961, %v2034
    %v2036 = vpop.f32.mrb[0].mxu0
    %2037 = vdwg.mxu0
    %v2038 = vmax.f32 %v2030, 0.0
    %v2039 = vmax.f32 %v2035, 0.0
    %v2040 = vadd.f32 %v2038, %v1774
    %v2041 = vadd.f32 %v2039, %v1775
    %v2042 = vld [vmem:[%s15] sm:$0xff]
    %v2043 = vld [vmem:[%s15 + $0x8] sm:$0xff]
    %v2044 = vld [vmem:[%s16] sm:$0xff]
    %v2045 = vld [vmem:[%s16 + $0x8] sm:$0xff]
    %v2046 = vsel %vm70, %v2040, 0.0
    %2047 = vadd.xlane.f32.xlu0 %v2046
    %v2048 = vpop.xlane.xlu0 %2047
    %v2049 = vrot.slane %v2048, 4
    %v2050 = vadd.f32 %v2048, %v2049
    %v2051 = vrot.slane %v2050, 2
    %v2052 = vadd.f32 %v2050, %v2051
    %v2053 = vrot.slane %v2052, 1
    %v2054 = vadd.f32 %v2052, %v2053
    %s2055 = vtos %v2054
    %v2056 = vstv %s2055
    %v2057 = vmul.f32 %v2040, %v2040
    %v2058 = vsel %vm70, %v2057, 0.0
    %2059 = vadd.xlane.f32.xlu0 %v2058
    %v2060 = vpop.xlane.xlu0 %2059
    %v2061 = vrot.slane %v2060, 4
    %v2062 = vadd.f32 %v2060, %v2061
    %v2063 = vrot.slane %v2062, 2
    %v2064 = vadd.f32 %v2062, %v2063
    %v2065 = vrot.slane %v2064, 1
    %v2066 = vadd.f32 %v2064, %v2065
    %s2067 = vtos %v2066
    %v2068 = vstv %s2067
    %v2069 = vmul.f32 %v2056, 0.00390625
    %v2070 = vmul.f32 %v2068, 0.00390625
    %v2071 = vmul.f32 %v2069, %v2069
    %v2072 = vsub.f32 %v2070, %v2071
    %v2073 = vsub.f32 %v2040, %v2069
    %v2074 = vadd.f32 %v2072, 1e-05
    %v2075 = vrsqrt.pop %v2074
    %v2076 = vmul.f32 %v2073, %v2075
    %v2077 = vsel %vm70, %v2041, 0.0
    %2078 = vadd.xlane.f32.xlu0 %v2077
    %v2079 = vpop.xlane.xlu0 %2078
    %v2080 = vrot.slane %v2079, 4
    %v2081 = vadd.f32 %v2079, %v2080
    %v2082 = vrot.slane %v2081, 2
    %v2083 = vadd.f32 %v2081, %v2082
    %v2084 = vrot.slane %v2083, 1
    %v2085 = vadd.f32 %v2083, %v2084
    %s2086 = vtos %v2085
    %v2087 = vstv %s2086
    %v2088 = vmul.f32 %v2041, %v2041
    %v2089 = vsel %vm70, %v2088, 0.0
    %2090 = vadd.xlane.f32.xlu0 %v2089
    %v2091 = vpop.xlane.xlu0 %2090
    %v2092 = vrot.slane %v2091, 4
    %v2093 = vadd.f32 %v2091, %v2092
    %v2094 = vrot.slane %v2093, 2
    %v2095 = vadd.f32 %v2093, %v2094
    %v2096 = vrot.slane %v2095, 1
    %v2097 = vadd.f32 %v2095, %v2096
    %s2098 = vtos %v2097
    %v2099 = vstv %s2098
    %v2100 = vmul.f32 %v2087, 0.00390625
    %v2101 = vmul.f32 %v2099, 0.00390625
    %v2102 = vmul.f32 %v2100, %v2100
    %v2103 = vsub.f32 %v2101, %v2102
    %v2104 = vsub.f32 %v2041, %v2100
    %v2105 = vadd.f32 %v2103, 1e-05
    %v2106 = vrsqrt.pop %v2105
    %v2107 = vmul.f32 %v2104, %v2106
    %v2108 = vmul.f32 %v2076, %v2042
    %v2109 = vmul.f32 %v2107, %v2043
    %v2110 = vadd.f32 %v2108, %v2044
    %v2111 = vadd.f32 %v2109, %v2045
    %2112 = vst.msk [vmem:[#allocation3] sm:$0xff] %vm70, %v2110
    %2113 = vst.msk [vmem:[#allocation3 + $0x8] sm:$0xff] %vm70, %v2111
    // Predicated region
    $region70: #{transformer_encoder_block.1} parent=1 // pred_check
      _
    $region71: #{transformer_encoder_block.1} parent=1 // pred_check_branch
      %2115 = sbr.rel (0) target = $region73
    $region72: #{transformer_encoder_block.1} parent=1 // pred_region
      %s2117 = ssub.s32 256, 256
      %2118 = vsyncadd [#allocation4], %s2117
      %s2119 = sshll.u32 [#allocation3], 4
      %s2120 = int_to_ptr.vmem [resolvable:$true] %s2119
      %2125 = dma.vmem_to_hbm [thread:$0]  %s2120, 256, %s17, [#allocation4], 128, 128, 8
    $region73: #{transformer_encoder_block.1} parent=1 // pred_fallthru
      _
    // Predicated region
    $region74: #{transformer_encoder_block.1} parent=1 // pred_check
      _
    $region75: #{transformer_encoder_block.1} parent=1 // pred_check_branch
      %2127 = sbr.rel (0) target = $region77
    $region76: #{transformer_encoder_block.1} parent=1 // pred_region
      %2128 = dma.done [#allocation4], 256
    $region77: #{transformer_encoder_block.1} parent=1 // pred_fallthru
      _
    %2129 = vsyncpa [#allocation4], 1

</llo_original>
